<compile_context>
chip_gen: v7x
topology: tpu7x:2x2x1
jax: 0.10.0
libtpu: 0.0.40
codegen_flags: <defaults>
</compile_context>

<pallas_src>
import jax
import jax.numpy as jnp
from jax.experimental import pallas as pl
from jax.experimental.pallas import tpu as pltpu

NUM_CLASSES = 4
KSIZE = 3
SEQ_LEN = 24            # 24 -> 12 -> 6, so flattened_size == 64 * 6 as in the module
IN_CHANNELS = 3
EPS = 1e-5              # BatchNorm1d default eps
LOGIT_PAD = 128         # lane-dense logits width
NEG_BIG = -1e30         # pad bias for unused logit lanes


# ------------------------------------ kernel ------------------------------------

def seasonal_cnn_kernel(x_ref,
                        w1e_ref, w1o_ref, s1_ref,
                        w2e_ref, w2o_ref, s2_ref,
                        w3_ref, s3_ref,
                        w4_ref, b4_ref, w5_ref, b5_ref,
                        out_ref):
    f32 = jnp.float32
    bf16 = jnp.bfloat16

    xb = x_ref[...].astype(bf16)                                            # (TB, 72)

    # conv block 1: conv+BN(scale folded) as even/odd matmuls, pool = max, +shift, ReLU
    e = jnp.dot(xb, w1e_ref[...], preferred_element_type=f32)               # (TB, 192)
    o = jnp.dot(xb, w1o_ref[...], preferred_element_type=f32)
    h = jnp.maximum(jnp.maximum(e, o) + s1_ref[...], 0.0)                   # (TB, 192)

    # conv block 2 (Dropout(0.25) is identity in eval mode)
    hb = h.astype(bf16)
    e = jnp.dot(hb, w2e_ref[...], preferred_element_type=f32)               # (TB, 192)
    o = jnp.dot(hb, w2o_ref[...], preferred_element_type=f32)
    h = jnp.maximum(jnp.maximum(e, o) + s2_ref[...], 0.0)                   # (TB, 192)

    # conv block 3 (no pool); columns already in torch.flatten (channel-major) order
    hb = h.astype(bf16)
    h = jnp.dot(hb, w3_ref[...], preferred_element_type=f32)                # (TB, 384)
    h = jnp.maximum(h + s3_ref[...], 0.0)

    # Linear(384 -> 256) + ReLU   (Dropout(0.125) identity in eval mode)
    hb = h.astype(bf16)
    h = jnp.maximum(jnp.dot(hb, w4_ref[...], preferred_element_type=f32) + b4_ref[...], 0.0)

    # Linear(256 -> 4), padded to 128 lanes (pad bias = -1e30), + log_softmax
    hb = h.astype(bf16)
    logits = jnp.dot(hb, w5_ref[...], preferred_element_type=f32) + b5_ref[...]   # (TB, 128)
    m = jnp.max(logits, axis=-1, keepdims=True)
    s = logits - m
    out_ref[...] = s - jnp.log(jnp.sum(jnp.exp(s), axis=-1, keepdims=True))


# ------------------------------------ wrapper ------------------------------------

def _round_up(x, m):
    return ((x + m - 1) // m) * m


def seasonal_cnn1d_forward(x_ncl, kparams, *, max_batch_tile=1024):
    """x_ncl: (B, C, L) in PyTorch NCL layout. Returns (B, NUM_CLASSES) log-probs."""
    B, C, L = x_ncl.shape
    # NCL is contiguous -> feature index c*L + l; w1 rows were permuted to match, so no
    # transpose (and no extra HBM pass over x) is needed.
    x = x_ncl.astype(jnp.float32).reshape(B, C * L)

    max_batch_tile = max(8, (max_batch_tile // 8) * 8)   # keep TB a multiple of 8
    B8 = _round_up(B, 8)
    if B8 != B:
        x = jnp.pad(x, ((0, B8 - B), (0, 0)))            # at most 7 padded rows

    # Aim for >= 2 grid steps when possible so both v7x TensorCores get work; the extra
    # ~0.35us/step is negligible on single-TC chips (v5e/v6e).
    if B8 >= 16:
        tb = _round_up(pl.cdiv(B8, 2), 8)
    else:
        tb = B8
    TB = min(tb, max_batch_tile)
    grid = (pl.cdiv(B8, TB),)                            # ragged last block is masked by Pallas

    def const_spec(arr):                                 # all constants are 2-D, resident per step
        return pl.BlockSpec(arr.shape, lambda b: (0, 0))

    in_specs = [pl.BlockSpec((TB, C * L), lambda b: (b, 0))] + [const_spec(a) for a in kparams]

    out = pl.pallas_call(
        seasonal_cnn_kernel,
        out_shape=jax.ShapeDtypeStruct((B8, LOGIT_PAD), jnp.float32),
        grid=grid,
        in_specs=in_specs,
        out_specs=pl.BlockSpec((TB, LOGIT_PAD), lambda b: (b, 0)),
        compiler_params=pltpu.CompilerParams(
            dimension_semantics=("parallel",),
            vmem_limit_bytes=32 * 1024 * 1024,           # v5e default scoped VMEM is only 16 MiB
        ),
    )(x, *kparams)
    return out[:B, :NUM_CLASSES]


# --------------------- host-side lowering of conv/BN to dense matmuls ---------------------

def _conv_as_matrix(cw, L):
    """Dense tensor (L*Cin, L, Cout) for a 'same' zero-padded Conv1d (no bias).
    Input feature index = l_in*Cin + cin; output indexed by (l_out, cout)."""
    Cout, Cin, K = cw.shape
    pad = K // 2
    li = jnp.arange(L)[:, None]
    lo = jnp.arange(L)[None, :]
    T = jnp.zeros((L, Cin, L, Cout), jnp.float32)
    for t in range(K):
        sel = (li == lo + (t - pad)).astype(jnp.float32)                  # (L_in, L_out)
        T = T + sel[:, None, :, None] * jnp.transpose(cw[:, :, t])[None, :, None, :]
    return T.reshape(L * Cin, L, Cout)


def _fold_bn(p):
    scale = p['gamma'] / jnp.sqrt(p['var'] + EPS)
    shift = (p['b'] - p['mean']) * scale + p['beta']
    return scale, shift


def build_kernel_params(raw):
    bf16 = jnp.bfloat16

    def conv_pool_block(p, L, first=False):
        """Conv+BN(scale folded)+pool split into even/odd weight matrices + per-column shift."""
        Cout, Cin, _ = p['w'].shape
        scale, shift = _fold_bn(p)
        T = _conv_as_matrix(p['w'], L)                                    # (L*Cin, L, Cout)
        if first:
            # permute rows to cin*L + l so x_ncl.reshape(B, C*L) is fed without a transpose
            T = T.reshape(L, Cin, L, Cout).transpose(1, 0, 2, 3).reshape(L * Cin, L, Cout)
        T = T * scale[None, None, :]                                      # fold BN scale into W
        we = T[:, 0::2, :].reshape(L * Cin, (L // 2) * Cout).astype(bf16)
        wo = T[:, 1::2, :].reshape(L * Cin, (L // 2) * Cout).astype(bf16)
        sh = jnp.tile(shift, L // 2).reshape(1, -1).astype(jnp.float32)   # column = l_half*Cout + c
        return we, wo, sh

    w1e, w1o, s1 = conv_pool_block(raw['conv1'], 24, first=True)
    w2e, w2o, s2 = conv_pool_block(raw['conv2'], 12)

    # block 3: columns channel-major (c*6 + l) == torch.flatten on (B, 64, 6); scale folded
    p3 = raw['conv3']
    scale3, shift3 = _fold_bn(p3)
    T3 = _conv_as_matrix(p3['w'], 6) * scale3[None, None, :]              # (192, 6, 64)
    w3 = T3.transpose(0, 2, 1).reshape(6 * 32, 64 * 6).astype(bf16)
    s3 = jnp.repeat(shift3, 6).reshape(1, -1).astype(jnp.float32)

    w4 = raw['fc1_w'].T.astype(bf16)                                      # (384, 256)
    b4 = raw['fc1_b'].reshape(1, -1).astype(jnp.float32)

    # fc2 padded to 128 lane-dense logits; pad bias = -1e30 so log_softmax ignores pad lanes
    w5 = jnp.zeros((256, LOGIT_PAD), jnp.float32).at[:, :NUM_CLASSES].set(raw['fc2_w'].T).astype(bf16)
    b5 = jnp.full((1, LOGIT_PAD), NEG_BIG, jnp.float32).at[0, :NUM_CLASSES].set(raw['fc2_b'])

    return (w1e, w1o, s1, w2e, w2o, s2, w3, s3, w4, b4, w5, b5)


# --------------------------- deterministic parameters & reference ---------------------------

def init_raw_params(key):
    ks = jax.random.split(key, 22)

    def u(k, shape, lo=-0.2, hi=0.2):
        return jax.random.uniform(k, shape, jnp.float32, lo, hi)

    def conv(i, cout, cin):
        return dict(w=u(ks[i], (cout, cin, KSIZE)), b=u(ks[i + 1], (cout,)),
                    gamma=u(ks[i + 2], (cout,), 0.5, 1.5), beta=u(ks[i + 3], (cout,)),
                    mean=u(ks[i + 4], (cout,)), var=u(ks[i + 5], (cout,), 0.5, 1.5))

    return dict(conv1=conv(0, 16, IN_CHANNELS),
                conv2=conv(6, 32, 16),
                conv3=conv(12, 64, 32),
                fc1_w=u(ks[18], (256, 64 * 6)), fc1_b=u(ks[19], (256,)),
                fc2_w=u(ks[20], (NUM_CLASSES, 256)), fc2_b=u(ks[21], (NUM_CLASSES,)))


def reference_forward(x_ncl, raw):
    """Pure-JAX replica of SeasonalCNN1D.forward (eval mode) for correctness checking."""
    def conv_bn_relu(x, p):                                               # x: (B, Cin, L)
        L = x.shape[2]
        K = p['w'].shape[2]
        pad = K // 2
        xp = jnp.pad(x, ((0, 0), (0, 0), (pad, pad)))
        taps = jnp.stack([xp[:, :, t:t + L] for t in range(K)], axis=-1)  # (B, Cin, L, K)
        y = jnp.einsum('bilt,oit->bol', taps, p['w']) + p['b'][None, :, None]
        y = (y - p['mean'][None, :, None]) / jnp.sqrt(p['var'] + EPS)[None, :, None] \
            * p['gamma'][None, :, None] + p['beta'][None, :, None]
        return jnp.maximum(y, 0.0)

    def pool2(x):
        B, C, L = x.shape
        return x.reshape(B, C, L // 2, 2).max(axis=-1)

    h = pool2(conv_bn_relu(x_ncl, raw['conv1']))
    h = pool2(conv_bn_relu(h, raw['conv2']))
    h = conv_bn_relu(h, raw['conv3'])
    h = h.reshape(h.shape[0], -1)                                         # torch.flatten(x, 1)
    h = jnp.maximum(h @ raw['fc1_w'].T + raw['fc1_b'], 0.0)
    logits = h @ raw['fc2_w'].T + raw['fc2_b']
    return jax.nn.log_softmax(logits, axis=-1)


if __name__ == "__main__":
    key = jax.random.PRNGKey(0)
    kx, kp = jax.random.split(key)

    B = 2
    x = jax.random.normal(kx, (B, IN_CHANNELS, SEQ_LEN), jnp.float32)     # NCL like PyTorch
    raw = init_raw_params(kp)
    kparams = build_kernel_params(raw)

    out = seasonal_cnn1d_forward(x, kparams)
    out = jax.block_until_ready(out)

    assert out.shape == (B, NUM_CLASSES)
    assert bool(jnp.all(jnp.isfinite(out)))
    # rows of exp(log_softmax) should sum to ~1
    assert bool(jnp.allclose(jnp.sum(jnp.exp(out), axis=1), 1.0, atol=1e-4))
    # compare against the pure-JAX reference (loose tol: bf16 MXU operand precision)
    ref = reference_forward(x, raw)
    assert float(jnp.max(jnp.abs(out - ref))) < 5e-2
    print("KERNEL_OK")
</pallas_src>

<mosaic_0001>
module attributes {stable_mosaic.version = 11 : i64} {
  func.func @seasonal_cnn_kernel(%arg0: i32, %arg1: memref<8x72xf32, #tpu.memory_space<vmem>>, %arg2: memref<72x192xbf16, #tpu.memory_space<vmem>>, %arg3: memref<72x192xbf16, #tpu.memory_space<vmem>>, %arg4: memref<1x192xf32, #tpu.memory_space<vmem>>, %arg5: memref<192x192xbf16, #tpu.memory_space<vmem>>, %arg6: memref<192x192xbf16, #tpu.memory_space<vmem>>, %arg7: memref<1x192xf32, #tpu.memory_space<vmem>>, %arg8: memref<192x384xbf16, #tpu.memory_space<vmem>>, %arg9: memref<1x384xf32, #tpu.memory_space<vmem>>, %arg10: memref<384x256xbf16, #tpu.memory_space<vmem>>, %arg11: memref<1x256xf32, #tpu.memory_space<vmem>>, %arg12: memref<256x128xbf16, #tpu.memory_space<vmem>>, %arg13: memref<1x128xf32, #tpu.memory_space<vmem>>, %arg14: memref<8x128xf32, #tpu.memory_space<vmem>>) attributes {dimension_semantics = [#tpu.dimension_semantics<parallel>], iteration_bounds = array<i64: 1>, scalar_prefetch = 0 : i64, scratch_operands = 0 : i64, tpu.core_type = #tpu.core_type<tc>, window_params = [{transform_indices = @transform_0, window_bounds = array<i64: 8, 72>}, {pipeline_mode = #tpu.pipeline_mode<synchronous>, transform_indices = @transform_1, window_bounds = array<i64: 72, 192>}, {pipeline_mode = #tpu.pipeline_mode<synchronous>, transform_indices = @transform_2, window_bounds = array<i64: 72, 192>}, {pipeline_mode = #tpu.pipeline_mode<synchronous>, transform_indices = @transform_3, window_bounds = array<i64: 1, 192>}, {pipeline_mode = #tpu.pipeline_mode<synchronous>, transform_indices = @transform_4, window_bounds = array<i64: 192, 192>}, {pipeline_mode = #tpu.pipeline_mode<synchronous>, transform_indices = @transform_5, window_bounds = array<i64: 192, 192>}, {pipeline_mode = #tpu.pipeline_mode<synchronous>, transform_indices = @transform_6, window_bounds = array<i64: 1, 192>}, {pipeline_mode = #tpu.pipeline_mode<synchronous>, transform_indices = @transform_7, window_bounds = array<i64: 192, 384>}, {pipeline_mode = #tpu.pipeline_mode<synchronous>, transform_indices = @transform_8, window_bounds = array<i64: 1, 384>}, {pipeline_mode = #tpu.pipeline_mode<synchronous>, transform_indices = @transform_9, window_bounds = array<i64: 384, 256>}, {pipeline_mode = #tpu.pipeline_mode<synchronous>, transform_indices = @transform_10, window_bounds = array<i64: 1, 256>}, {pipeline_mode = #tpu.pipeline_mode<synchronous>, transform_indices = @transform_11, window_bounds = array<i64: 256, 128>}, {pipeline_mode = #tpu.pipeline_mode<synchronous>, transform_indices = @transform_12, window_bounds = array<i64: 1, 128>}, {transform_indices = @transform_13, window_bounds = array<i64: 8, 128>}]} {
    %c0 = arith.constant 0 : index
    %c0_0 = arith.constant 0 : index
    %0 = vector.load %arg1[%c0, %c0_0] : memref<8x72xf32, #tpu.memory_space<vmem>>, vector<8x72xf32>
    %1 = arith.truncf %0 : vector<8x72xf32> to vector<8x72xbf16>
    %c0_1 = arith.constant 0 : index
    %c0_2 = arith.constant 0 : index
    %2 = vector.load %arg2[%c0_1, %c0_2] : memref<72x192xbf16, #tpu.memory_space<vmem>>, vector<72x192xbf16>
    %cst = arith.constant dense<0.000000e+00> : vector<8x192xf32>
    %3 = tpu.matmul %1, %2, %cst {dimension_numbers = #tpu.dot_dimension_numbers<[1], [0], [0], [1], [0, 0, 1, 1], [], []>} : vector<8x72xbf16>, vector<72x192xbf16>, vector<8x192xf32> -> vector<8x192xf32>
    %c0_3 = arith.constant 0 : index
    %c0_4 = arith.constant 0 : index
    %4 = vector.load %arg3[%c0_3, %c0_4] : memref<72x192xbf16, #tpu.memory_space<vmem>>, vector<72x192xbf16>
    %cst_5 = arith.constant dense<0.000000e+00> : vector<8x192xf32>
    %5 = tpu.matmul %1, %4, %cst_5 {dimension_numbers = #tpu.dot_dimension_numbers<[1], [0], [0], [1], [0, 0, 1, 1], [], []>} : vector<8x72xbf16>, vector<72x192xbf16>, vector<8x192xf32> -> vector<8x192xf32>
    %6 = arith.maximumf %3, %5 : vector<8x192xf32>
    %c0_6 = arith.constant 0 : index
    %c0_7 = arith.constant 0 : index
    %7 = vector.load %arg4[%c0_6, %c0_7] : memref<1x192xf32, #tpu.memory_space<vmem>>, vector<1x192xf32>
    %8 = vector.broadcast %7 : vector<1x192xf32> to vector<8x192xf32>
    %9 = arith.addf %6, %8 : vector<8x192xf32>
    %cst_8 = arith.constant 0.000000e+00 : f32
    %10 = vector.broadcast %cst_8 : f32 to vector<8x192xf32>
    %11 = arith.maximumf %9, %10 : vector<8x192xf32>
    %12 = arith.truncf %11 : vector<8x192xf32> to vector<8x192xbf16>
    %c0_9 = arith.constant 0 : index
    %c0_10 = arith.constant 0 : index
    %13 = vector.load %arg5[%c0_9, %c0_10] : memref<192x192xbf16, #tpu.memory_space<vmem>>, vector<192x192xbf16>
    %cst_11 = arith.constant dense<0.000000e+00> : vector<8x192xf32>
    %14 = tpu.matmul %12, %13, %cst_11 {dimension_numbers = #tpu.dot_dimension_numbers<[1], [0], [0], [1], [0, 0, 1, 1], [], []>} : vector<8x192xbf16>, vector<192x192xbf16>, vector<8x192xf32> -> vector<8x192xf32>
    %c0_12 = arith.constant 0 : index
    %c0_13 = arith.constant 0 : index
    %15 = vector.load %arg6[%c0_12, %c0_13] : memref<192x192xbf16, #tpu.memory_space<vmem>>, vector<192x192xbf16>
    %cst_14 = arith.constant dense<0.000000e+00> : vector<8x192xf32>
    %16 = tpu.matmul %12, %15, %cst_14 {dimension_numbers = #tpu.dot_dimension_numbers<[1], [0], [0], [1], [0, 0, 1, 1], [], []>} : vector<8x192xbf16>, vector<192x192xbf16>, vector<8x192xf32> -> vector<8x192xf32>
    %17 = arith.maximumf %14, %16 : vector<8x192xf32>
    %c0_15 = arith.constant 0 : index
    %c0_16 = arith.constant 0 : index
    %18 = vector.load %arg7[%c0_15, %c0_16] : memref<1x192xf32, #tpu.memory_space<vmem>>, vector<1x192xf32>
    %19 = vector.broadcast %18 : vector<1x192xf32> to vector<8x192xf32>
    %20 = arith.addf %17, %19 : vector<8x192xf32>
    %cst_17 = arith.constant 0.000000e+00 : f32
    %21 = vector.broadcast %cst_17 : f32 to vector<8x192xf32>
    %22 = arith.maximumf %20, %21 : vector<8x192xf32>
    %23 = arith.truncf %22 : vector<8x192xf32> to vector<8x192xbf16>
    %c0_18 = arith.constant 0 : index
    %c0_19 = arith.constant 0 : index
    %24 = vector.load %arg8[%c0_18, %c0_19] : memref<192x384xbf16, #tpu.memory_space<vmem>>, vector<192x384xbf16>
    %cst_20 = arith.constant dense<0.000000e+00> : vector<8x384xf32>
    %25 = tpu.matmul %23, %24, %cst_20 {dimension_numbers = #tpu.dot_dimension_numbers<[1], [0], [0], [1], [0, 0, 1, 1], [], []>} : vector<8x192xbf16>, vector<192x384xbf16>, vector<8x384xf32> -> vector<8x384xf32>
    %c0_21 = arith.constant 0 : index
    %c0_22 = arith.constant 0 : index
    %26 = vector.load %arg9[%c0_21, %c0_22] : memref<1x384xf32, #tpu.memory_space<vmem>>, vector<1x384xf32>
    %27 = vector.broadcast %26 : vector<1x384xf32> to vector<8x384xf32>
    %28 = arith.addf %25, %27 : vector<8x384xf32>
    %cst_23 = arith.constant 0.000000e+00 : f32
    %29 = vector.broadcast %cst_23 : f32 to vector<8x384xf32>
    %30 = arith.maximumf %28, %29 : vector<8x384xf32>
    %31 = arith.truncf %30 : vector<8x384xf32> to vector<8x384xbf16>
    %c0_24 = arith.constant 0 : index
    %c0_25 = arith.constant 0 : index
    %32 = vector.load %arg10[%c0_24, %c0_25] : memref<384x256xbf16, #tpu.memory_space<vmem>>, vector<384x256xbf16>
    %cst_26 = arith.constant dense<0.000000e+00> : vector<8x256xf32>
    %33 = tpu.matmul %31, %32, %cst_26 {dimension_numbers = #tpu.dot_dimension_numbers<[1], [0], [0], [1], [0, 0, 1, 1], [], []>} : vector<8x384xbf16>, vector<384x256xbf16>, vector<8x256xf32> -> vector<8x256xf32>
    %c0_27 = arith.constant 0 : index
    %c0_28 = arith.constant 0 : index
    %34 = vector.load %arg11[%c0_27, %c0_28] : memref<1x256xf32, #tpu.memory_space<vmem>>, vector<1x256xf32>
    %35 = vector.broadcast %34 : vector<1x256xf32> to vector<8x256xf32>
    %36 = arith.addf %33, %35 : vector<8x256xf32>
    %cst_29 = arith.constant 0.000000e+00 : f32
    %37 = vector.broadcast %cst_29 : f32 to vector<8x256xf32>
    %38 = arith.maximumf %36, %37 : vector<8x256xf32>
    %39 = arith.truncf %38 : vector<8x256xf32> to vector<8x256xbf16>
    %c0_30 = arith.constant 0 : index
    %c0_31 = arith.constant 0 : index
    %40 = vector.load %arg12[%c0_30, %c0_31] : memref<256x128xbf16, #tpu.memory_space<vmem>>, vector<256x128xbf16>
    %cst_32 = arith.constant dense<0.000000e+00> : vector<8x128xf32>
    %41 = tpu.matmul %39, %40, %cst_32 {dimension_numbers = #tpu.dot_dimension_numbers<[1], [0], [0], [1], [0, 0, 1, 1], [], []>} : vector<8x256xbf16>, vector<256x128xbf16>, vector<8x128xf32> -> vector<8x128xf32>
    %c0_33 = arith.constant 0 : index
    %c0_34 = arith.constant 0 : index
    %42 = vector.load %arg13[%c0_33, %c0_34] : memref<1x128xf32, #tpu.memory_space<vmem>>, vector<1x128xf32>
    %43 = vector.broadcast %42 : vector<1x128xf32> to vector<8x128xf32>
    %44 = arith.addf %41, %43 : vector<8x128xf32>
    %cst_35 = arith.constant dense<0xFF800000> : vector<8xf32>
    %45 = vector.multi_reduction <maximumf>, %44, %cst_35 [1] : vector<8x128xf32> to vector<8xf32>
    %46 = vector.shape_cast %45 : vector<8xf32> to vector<8x1xf32>
    %47 = vector.broadcast %46 : vector<8x1xf32> to vector<8x128xf32>
    %48 = arith.subf %44, %47 : vector<8x128xf32>
    %49 = math.exp %48 : vector<8x128xf32>
    %cst_36 = arith.constant dense<0.000000e+00> : vector<8xf32>
    %50 = vector.multi_reduction <add>, %49, %cst_36 [1] : vector<8x128xf32> to vector<8xf32>
    %51 = vector.shape_cast %50 : vector<8xf32> to vector<8x1xf32>
    %52 = math.log %51 : vector<8x1xf32>
    %53 = vector.broadcast %52 : vector<8x1xf32> to vector<8x128xf32>
    %54 = arith.subf %48, %53 : vector<8x128xf32>
    %c0_37 = arith.constant 0 : index
    %c0_38 = arith.constant 0 : index
    %55 = vector.load %arg14[%c0_37, %c0_38] : memref<8x128xf32, #tpu.memory_space<vmem>>, vector<8x128xf32>
    tpu.vector_store %arg14[%c0_37, %c0_38], %54 {strides = array<i32>} : memref<8x128xf32, #tpu.memory_space<vmem>>, vector<8x128xf32>,
    return
  }
  func.func @transform_0(%arg0: i32) -> (i32, i32) {
    %c0_i32 = arith.constant 0 : i32
    %c0_i32_0 = arith.constant 0 : i32
    return %arg0, %c0_i32 : i32, i32
  }
  func.func @transform_1(%arg0: i32) -> (i32, i32) {
    %c0_i32 = arith.constant 0 : i32
    %c0_i32_0 = arith.constant 0 : i32
    %c0_i32_1 = arith.constant 0 : i32
    return %c0_i32, %c0_i32_0 : i32, i32
  }
  func.func @transform_2(%arg0: i32) -> (i32, i32) {
    %c0_i32 = arith.constant 0 : i32
    %c0_i32_0 = arith.constant 0 : i32
    %c0_i32_1 = arith.constant 0 : i32
    return %c0_i32, %c0_i32_0 : i32, i32
  }
  func.func @transform_3(%arg0: i32) -> (i32, i32) {
    %c0_i32 = arith.constant 0 : i32
    %c0_i32_0 = arith.constant 0 : i32
    %c0_i32_1 = arith.constant 0 : i32
    return %c0_i32, %c0_i32_0 : i32, i32
  }
  func.func @transform_4(%arg0: i32) -> (i32, i32) {
    %c0_i32 = arith.constant 0 : i32
    %c0_i32_0 = arith.constant 0 : i32
    %c0_i32_1 = arith.constant 0 : i32
    return %c0_i32, %c0_i32_0 : i32, i32
  }
  func.func @transform_5(%arg0: i32) -> (i32, i32) {
    %c0_i32 = arith.constant 0 : i32
    %c0_i32_0 = arith.constant 0 : i32
    %c0_i32_1 = arith.constant 0 : i32
    return %c0_i32, %c0_i32_0 : i32, i32
  }
  func.func @transform_6(%arg0: i32) -> (i32, i32) {
    %c0_i32 = arith.constant 0 : i32
    %c0_i32_0 = arith.constant 0 : i32
    %c0_i32_1 = arith.constant 0 : i32
    return %c0_i32, %c0_i32_0 : i32, i32
  }
  func.func @transform_7(%arg0: i32) -> (i32, i32) {
    %c0_i32 = arith.constant 0 : i32
    %c0_i32_0 = arith.constant 0 : i32
    %c0_i32_1 = arith.constant 0 : i32
    return %c0_i32, %c0_i32_0 : i32, i32
  }
  func.func @transform_8(%arg0: i32) -> (i32, i32) {
    %c0_i32 = arith.constant 0 : i32
    %c0_i32_0 = arith.constant 0 : i32
    %c0_i32_1 = arith.constant 0 : i32
    return %c0_i32, %c0_i32_0 : i32, i32
  }
  func.func @transform_9(%arg0: i32) -> (i32, i32) {
    %c0_i32 = arith.constant 0 : i32
    %c0_i32_0 = arith.constant 0 : i32
    %c0_i32_1 = arith.constant 0 : i32
    return %c0_i32, %c0_i32_0 : i32, i32
  }
  func.func @transform_10(%arg0: i32) -> (i32, i32) {
    %c0_i32 = arith.constant 0 : i32
    %c0_i32_0 = arith.constant 0 : i32
    %c0_i32_1 = arith.constant 0 : i32
    return %c0_i32, %c0_i32_0 : i32, i32
  }
  func.func @transform_11(%arg0: i32) -> (i32, i32) {
    %c0_i32 = arith.constant 0 : i32
    %c0_i32_0 = arith.constant 0 : i32
    %c0_i32_1 = arith.constant 0 : i32
    return %c0_i32, %c0_i32_0 : i32, i32
  }
  func.func @transform_12(%arg0: i32) -> (i32, i32) {
    %c0_i32 = arith.constant 0 : i32
    %c0_i32_0 = arith.constant 0 : i32
    %c0_i32_1 = arith.constant 0 : i32
    return %c0_i32, %c0_i32_0 : i32, i32
  }
  func.func @transform_13(%arg0: i32) -> (i32, i32) {
    %c0_i32 = arith.constant 0 : i32
    %c0_i32_0 = arith.constant 0 : i32
    return %arg0, %c0_i32 : i32, i32
  }
}

</mosaic_0001>

<llo_original>
// kernel: tpu_custom_call.1
$region0: #{tpu_custom_call.1}
  #allocation0 [shape = 'u32[]', space=smem, size = 0x4, offset = 0x4, fixed_abs, tag = 'smem constant byte address 0x4 - core index']
  #allocation1 [shape = 'u32[144,128]{1,0:T(1,128)}', space=vmem, size = 0x12000, scoped, tag = 'internal scratch']
  %s0 = inlined_call_operand.hbm [shape: f32[8,72], index: 0, kind: input, shape index: {}]
  %s1 = inlined_call_operand.hbm [shape: bf16[72,192], index: 1, kind: input, shape index: {}]
  %s2 = inlined_call_operand.hbm [shape: bf16[72,192], index: 2, kind: input, shape index: {}]
  %s3 = inlined_call_operand.vmem [shape: f32[1,192], index: 3, kind: input, shape index: {}]
  %s4 = inlined_call_operand.hbm [shape: bf16[192,192], index: 4, kind: input, shape index: {}]
  %s5 = inlined_call_operand.hbm [shape: bf16[192,192], index: 5, kind: input, shape index: {}]
  %s6 = inlined_call_operand.vmem [shape: f32[1,192], index: 6, kind: input, shape index: {}]
  %s7 = inlined_call_operand.hbm [shape: bf16[192,384], index: 7, kind: input, shape index: {}]
  %s8 = inlined_call_operand.vmem [shape: f32[1,384], index: 8, kind: input, shape index: {}]
  %s9 = inlined_call_operand.hbm [shape: bf16[384,256], index: 9, kind: input, shape index: {}]
  %s10 = inlined_call_operand.vmem [shape: f32[1,256], index: 10, kind: input, shape index: {}]
  %s11 = inlined_call_operand.hbm [shape: bf16[256,128], index: 11, kind: input, shape index: {}]
  %s12 = inlined_call_operand.vmem [shape: f32[1,128], index: 12, kind: input, shape index: {}]
  %s13 = inlined_call_operand.hbm [shape: f32[8,128], index: 13, kind: output, shape index: {}]
  %s14 = sld [smem:[#allocation0]]
  $region94: #{tpu_custom_call.1} parent=0
    _
  %s16 = ssub.s32 1, %s14
  %s17 = scalar_select 0, %s16, %s14
  $region1: #{tpu_custom_call.1} parent=0
    #allocation2 [shape = 'u8[4096]{0}', space=vmem, size = 0x1000, scoped, tag = 'input window, operand 0, single buffered']
    #allocation3 [shape = 's32[1]{0}', space=sflag, size = 0x4, scoped, tag = 'scoped memory for tpu_custom_call.1']
    #allocation4 [shape = 's32[1]{0}', space=sflag, size = 0x4, scoped, tag = 'scoped memory for tpu_custom_call.1']
    #allocation5 [shape = 'u8[36864]{0}', space=vmem, size = 0x9000, scoped, tag = 'input window, operand 1, single buffered']
    #allocation6 [shape = 's32[1]{0}', space=sflag, size = 0x4, scoped, tag = 'scoped memory for tpu_custom_call.1']
    #allocation7 [shape = 'u8[36864]{0}', space=vmem, size = 0x9000, scoped, tag = 'input window, operand 2, single buffered']
    #allocation8 [shape = 'u8[98304]{0}', space=vmem, size = 0x18000, scoped, tag = 'input window, operand 4, single buffered']
    #allocation9 [shape = 's32[1]{0}', space=sflag, size = 0x4, scoped, tag = 'scoped memory for tpu_custom_call.1']
    #allocation10 [shape = 'u8[98304]{0}', space=vmem, size = 0x18000, scoped, tag = 'input window, operand 5, single buffered']
    #allocation11 [shape = 'u8[147456]{0}', space=vmem, size = 0x24000, scoped, tag = 'input window, operand 7, single buffered']
    #allocation12 [shape = 's32[1]{0}', space=sflag, size = 0x4, scoped, tag = 'scoped memory for tpu_custom_call.1']
    #allocation13 [shape = 'u8[196608]{0}', space=vmem, size = 0x30000, scoped, tag = 'input window, operand 9, single buffered']
    #allocation14 [shape = 'u8[65536]{0}', space=vmem, size = 0x10000, scoped, tag = 'input window, operand 11, single buffered']
    #allocation15 [shape = 's32[1]{0}', space=sflag, size = 0x4, scoped, tag = 'scoped memory for tpu_custom_call.1']
    #allocation16 [shape = 'u8[4096]{0}', space=vmem, size = 0x1000, scoped, tag = 'output window, operand 0, single buffered']
    %18 = vsyncpa [#allocation3], 0
    %19 = vsyncpa [#allocation6], 0
    %20 = vsyncpa [#allocation9], 0
    %21 = vsyncpa [#allocation12], 0
    %22 = vsyncpa [#allocation15], 0
    %23 = vsyncpa [#allocation4], 0
    // Predicated region
    $region2: #{tpu_custom_call.1} parent=1 // pred_check
      _
    $region3: #{tpu_custom_call.1} parent=1 // pred_check_branch
      %25 = sbr.rel (0) target = $region5
    $region4: #{tpu_custom_call.1} parent=1 // pred_region
      %s27 = ssub.s32 128, 128
      %28 = vsyncadd [#allocation3], %s27
      %s30 = sshll.u32 [#allocation2], 4
      %s31 = int_to_ptr.vmem [resolvable:$true] %s30
      %33 = dma.hbm_to_vmem [thread:$0]  %s0, 128, %s31, [#allocation3]
    $region5: #{tpu_custom_call.1} parent=1 // pred_fallthru
      _
    // Predicated region
    $region6: #{tpu_custom_call.1} parent=1 // pred_check
      _
    $region7: #{tpu_custom_call.1} parent=1 // pred_check_branch
      %35 = sbr.rel (0) target = $region9
    $region8: #{tpu_custom_call.1} parent=1 // pred_region
      %s37 = ssub.s32 1152, 1152
      %38 = vsyncadd [#allocation6], %s37
      %s39 = sshll.u32 [#allocation5], 4
      %s40 = int_to_ptr.vmem [resolvable:$true] %s39
      %45 = dma.hbm_to_vmem [thread:$0]  %s1, 1152, %s40, [#allocation6], 128, 128, 8
    $region9: #{tpu_custom_call.1} parent=1 // pred_fallthru
      _
    // Predicated region
    $region10: #{tpu_custom_call.1} parent=1 // pred_check
      _
    $region11: #{tpu_custom_call.1} parent=1 // pred_check_branch
      %47 = sbr.rel (0) target = $region13
    $region12: #{tpu_custom_call.1} parent=1 // pred_region
      %s49 = ssub.s32 1152, 1152
      %50 = vsyncadd [#allocation6], %s49
      %s51 = sshll.u32 [#allocation7], 4
      %s52 = int_to_ptr.vmem [resolvable:$true] %s51
      %57 = dma.hbm_to_vmem [thread:$0]  %s2, 1152, %s52, [#allocation6], 128, 128, 8
    $region13: #{tpu_custom_call.1} parent=1 // pred_fallthru
      _
    // Predicated region
    $region14: #{tpu_custom_call.1} parent=1 // pred_check
      _
    $region15: #{tpu_custom_call.1} parent=1 // pred_check_branch
      %59 = sbr.rel (0) target = $region17
    $region16: #{tpu_custom_call.1} parent=1 // pred_region
      _
    $region17: #{tpu_custom_call.1} parent=1 // pred_fallthru
      _
    // Predicated region
    $region18: #{tpu_custom_call.1} parent=1 // pred_check
      _
    $region19: #{tpu_custom_call.1} parent=1 // pred_check_branch
      %61 = sbr.rel (0) target = $region21
    $region20: #{tpu_custom_call.1} parent=1 // pred_region
      %s63 = ssub.s32 3072, 3072
      %64 = vsyncadd [#allocation9], %s63
      %s65 = sshll.u32 [#allocation8], 4
      %s66 = int_to_ptr.vmem [resolvable:$true] %s65
      %71 = dma.hbm_to_vmem [thread:$0]  %s4, 3072, %s66, [#allocation9], 128, 128, 8
    $region21: #{tpu_custom_call.1} parent=1 // pred_fallthru
      _
    // Predicated region
    $region22: #{tpu_custom_call.1} parent=1 // pred_check
      _
    $region23: #{tpu_custom_call.1} parent=1 // pred_check_branch
      %73 = sbr.rel (0) target = $region25
    $region24: #{tpu_custom_call.1} parent=1 // pred_region
      %s75 = ssub.s32 3072, 3072
      %76 = vsyncadd [#allocation9], %s75
      %s77 = sshll.u32 [#allocation10], 4
      %s78 = int_to_ptr.vmem [resolvable:$true] %s77
      %83 = dma.hbm_to_vmem [thread:$0]  %s5, 3072, %s78, [#allocation9], 128, 128, 8
    $region25: #{tpu_custom_call.1} parent=1 // pred_fallthru
      _
    // Predicated region
    $region26: #{tpu_custom_call.1} parent=1 // pred_check
      _
    $region27: #{tpu_custom_call.1} parent=1 // pred_check_branch
      %85 = sbr.rel (0) target = $region29
    $region28: #{tpu_custom_call.1} parent=1 // pred_region
      _
    $region29: #{tpu_custom_call.1} parent=1 // pred_fallthru
      _
    // Predicated region
    $region30: #{tpu_custom_call.1} parent=1 // pred_check
      _
    $region31: #{tpu_custom_call.1} parent=1 // pred_check_branch
      %87 = sbr.rel (0) target = $region33
    $region32: #{tpu_custom_call.1} parent=1 // pred_region
      %s89 = ssub.s32 4608, 4608
      %90 = vsyncadd [#allocation12], %s89
      %s91 = sshll.u32 [#allocation11], 4
      %s92 = int_to_ptr.vmem [resolvable:$true] %s91
      %97 = dma.hbm_to_vmem [thread:$0]  %s7, 4608, %s92, [#allocation12], 192, 192, 12
    $region33: #{tpu_custom_call.1} parent=1 // pred_fallthru
      _
    // Predicated region
    $region34: #{tpu_custom_call.1} parent=1 // pred_check
      _
    $region35: #{tpu_custom_call.1} parent=1 // pred_check_branch
      %99 = sbr.rel (0) target = $region37
    $region36: #{tpu_custom_call.1} parent=1 // pred_region
      _
    $region37: #{tpu_custom_call.1} parent=1 // pred_fallthru
      _
    // Predicated region
    $region38: #{tpu_custom_call.1} parent=1 // pred_check
      _
    $region39: #{tpu_custom_call.1} parent=1 // pred_check_branch
      %101 = sbr.rel (0) target = $region41
    $region40: #{tpu_custom_call.1} parent=1 // pred_region
      %s103 = ssub.s32 6144, 6144
      %104 = vsyncadd [#allocation12], %s103
      %s105 = sshll.u32 [#allocation13], 4
      %s106 = int_to_ptr.vmem [resolvable:$true] %s105
      %111 = dma.hbm_to_vmem [thread:$0]  %s9, 6144, %s106, [#allocation12], 128, 128, 8
    $region41: #{tpu_custom_call.1} parent=1 // pred_fallthru
      _
    // Predicated region
    $region42: #{tpu_custom_call.1} parent=1 // pred_check
      _
    $region43: #{tpu_custom_call.1} parent=1 // pred_check_branch
      %113 = sbr.rel (0) target = $region45
    $region44: #{tpu_custom_call.1} parent=1 // pred_region
      _
    $region45: #{tpu_custom_call.1} parent=1 // pred_fallthru
      _
    // Predicated region
    $region46: #{tpu_custom_call.1} parent=1 // pred_check
      _
    $region47: #{tpu_custom_call.1} parent=1 // pred_check_branch
      %115 = sbr.rel (0) target = $region49
    $region48: #{tpu_custom_call.1} parent=1 // pred_region
      %s117 = ssub.s32 2048, 2048
      %118 = vsyncadd [#allocation15], %s117
      %s119 = sshll.u32 [#allocation14], 4
      %s120 = int_to_ptr.vmem [resolvable:$true] %s119
      %125 = dma.hbm_to_vmem [thread:$0]  %s11, 2048, %s120, [#allocation15], 64, 64, 4
    $region49: #{tpu_custom_call.1} parent=1 // pred_fallthru
      _
    // Predicated region
    $region50: #{tpu_custom_call.1} parent=1 // pred_check
      _
    $region51: #{tpu_custom_call.1} parent=1 // pred_check_branch
      %127 = sbr.rel (0) target = $region53
    $region52: #{tpu_custom_call.1} parent=1 // pred_region
      _
    $region53: #{tpu_custom_call.1} parent=1 // pred_fallthru
      _
    // Predicated region
    $region54: #{tpu_custom_call.1} parent=1 // pred_check
      _
    $region55: #{tpu_custom_call.1} parent=1 // pred_check_branch
      %129 = sbr.rel (0) target = $region57
    $region56: #{tpu_custom_call.1} parent=1 // pred_region
      %130 = dma.done [#allocation3], 128
    $region57: #{tpu_custom_call.1} parent=1 // pred_fallthru
      _
    // Predicated region
    $region58: #{tpu_custom_call.1} parent=1 // pred_check
      _
    $region59: #{tpu_custom_call.1} parent=1 // pred_check_branch
      %132 = sbr.rel (0) target = $region61
    $region60: #{tpu_custom_call.1} parent=1 // pred_region
      %133 = dma.done [#allocation6], 1152
    $region61: #{tpu_custom_call.1} parent=1 // pred_fallthru
      _
    // Predicated region
    $region62: #{tpu_custom_call.1} parent=1 // pred_check
      _
    $region63: #{tpu_custom_call.1} parent=1 // pred_check_branch
      %135 = sbr.rel (0) target = $region65
    $region64: #{tpu_custom_call.1} parent=1 // pred_region
      %136 = dma.done [#allocation6], 1152
    $region65: #{tpu_custom_call.1} parent=1 // pred_fallthru
      _
    // Predicated region
    $region66: #{tpu_custom_call.1} parent=1 // pred_check
      _
    $region67: #{tpu_custom_call.1} parent=1 // pred_check_branch
      %138 = sbr.rel (0) target = $region69
    $region68: #{tpu_custom_call.1} parent=1 // pred_region
      %139 = dma.done [#allocation9], 3072
    $region69: #{tpu_custom_call.1} parent=1 // pred_fallthru
      _
    // Predicated region
    $region70: #{tpu_custom_call.1} parent=1 // pred_check
      _
    $region71: #{tpu_custom_call.1} parent=1 // pred_check_branch
      %141 = sbr.rel (0) target = $region73
    $region72: #{tpu_custom_call.1} parent=1 // pred_region
      %142 = dma.done [#allocation9], 3072
    $region73: #{tpu_custom_call.1} parent=1 // pred_fallthru
      _
    // Predicated region
    $region74: #{tpu_custom_call.1} parent=1 // pred_check
      _
    $region75: #{tpu_custom_call.1} parent=1 // pred_check_branch
      %144 = sbr.rel (0) target = $region77
    $region76: #{tpu_custom_call.1} parent=1 // pred_region
      %145 = dma.done [#allocation12], 4608
    $region77: #{tpu_custom_call.1} parent=1 // pred_fallthru
      _
    // Predicated region
    $region78: #{tpu_custom_call.1} parent=1 // pred_check
      _
    $region79: #{tpu_custom_call.1} parent=1 // pred_check_branch
      %147 = sbr.rel (0) target = $region81
    $region80: #{tpu_custom_call.1} parent=1 // pred_region
      %148 = dma.done [#allocation12], 6144
    $region81: #{tpu_custom_call.1} parent=1 // pred_fallthru
      _
    // Predicated region
    $region82: #{tpu_custom_call.1} parent=1 // pred_check
      _
    $region83: #{tpu_custom_call.1} parent=1 // pred_check_branch
      %150 = sbr.rel (0) target = $region85
    $region84: #{tpu_custom_call.1} parent=1 // pred_region
      %151 = dma.done [#allocation15], 2048
    $region85: #{tpu_custom_call.1} parent=1 // pred_fallthru
      _
    %v153 = vld [vmem:[#allocation2] sm:$0xff]
    %v154 = vpack.c.bf16 %v153, %v153
    %v155 = vld [vmem:[#allocation5] sm:$0xff]
    %v156 = vld [vmem:[#allocation5 + $0x8] sm:$0xff]
    %v157 = vld [vmem:[#allocation5 + $0x10] sm:$0xff]
    %v158 = vld [vmem:[#allocation5 + $0x18] sm:$0xff]
    %v159 = vld [vmem:[#allocation5 + $0x20] sm:$0xff]
    %v160 = vld [vmem:[#allocation5 + $0x28] sm:$0xff]
    %v161 = vld [vmem:[#allocation5 + $0x30] sm:$0xff]
    %v162 = vld [vmem:[#allocation5 + $0x38] sm:$0xff]
    %v163 = vld [vmem:[#allocation5 + $0x40] sm:$0xff]
    %v173 = vunpack.c.l.b16 %v155
    %v174 = vunpack.c.h.b16 %v155
    %v175 = vunpack.c.l.b16 %v156
    %v176 = vunpack.c.h.b16 %v156
    %v177 = vunpack.c.l.b16 %v157
    %v178 = vunpack.c.h.b16 %v157
    %v179 = vunpack.c.l.b16 %v158
    %v180 = vunpack.c.h.b16 %v158
    %v181 = vunpack.c.l.b16 %v159
    %v182 = vunpack.c.h.b16 %v159
    %v183 = vunpack.c.l.b16 %v160
    %v184 = vunpack.c.h.b16 %v160
    %v185 = vunpack.c.l.b16 %v161
    %v186 = vunpack.c.h.b16 %v161
    %v187 = vunpack.c.l.b16 %v162
    %v188 = vunpack.c.h.b16 %v162
    %v189 = vunpack.c.l.b16 %v163
    %v190 = vunpack.c.h.b16 %v163
    %v191 = vpack.c.b16 %v175, %v173
    %v192 = vpack.c.b16 %v176, %v174
    %v193 = vpack.c.b16 %v179, %v177
    %v194 = vpack.c.b16 %v180, %v178
    %v195 = vpack.c.b16 %v183, %v181
    %v196 = vpack.c.b16 %v184, %v182
    %v197 = vpack.c.b16 %v187, %v185
    %v198 = vpack.c.b16 %v188, %v186
    %v199 = vpack.c.b16 %v189, %v189
    %v200 = vpack.c.b16 %v190, %v190
    %vm209 = vcmask 588800
    %v211 = vsel %vm209, %v154, 0
    %vm213 = vcmask 1043456
    %v215 = vsel %vm213, %v199, 0
    %v218 = vsel %vm213, %v200, 0
    %220 = vmatprep.subr.bf16.mxu0 %v192
    %221 = vmatpush1.bf16.msra.mxu0 %v191
    %222 = vmatprep.subr.bf16.mxu0 %v194
    %223 = vmatpush1.bf16.msra.mxu0 %v193
    %224 = vmatprep.subr.bf16.mxu0 %v196
    %225 = vmatpush1.bf16.msra.mxu0 %v195
    %226 = vmatprep.subr.bf16.mxu0 %v198
    %227 = vmatpush1.bf16.msra.mxu0 %v197
    %228 = vmatprep.subr.bf16.mxu0 %v218
    %229 = vmatpush1.bf16.msra.mxu0 %v215
    %230 = vmatprep.subr.bf16.mxu0 0
    %231 = vmatpush1.bf16.msra.mxu0 0
    %232 = vmatprep.subr.bf16.mxu0 0
    %233 = vmatpush1.bf16.msra.mxu0 0
    %234 = vmatprep.subr.bf16.mxu0 0
    %235 = vmatpush1.bf16.msra.mxu0 0
    %236 = vmatprep.subr.bf16.mxu0 0
    %237 = vmatpush1.bf16.msra.mxu0 0
    %238 = vmatprep.subr.bf16.mxu0 0
    %239 = vmatpush1.bf16.msra.mxu0 0
    %240 = vmatprep.subr.bf16.mxu0 0
    %241 = vmatpush1.bf16.msra.mxu0 0
    %242 = vmatprep.subr.bf16.mxu0 0
    %243 = vmatpush1.bf16.msra.mxu0 0
    %244 = vmatprep.subr.bf16.mxu0 0
    %245 = vmatpush1.bf16.msra.mxu0 0
    %246 = vmatprep.subr.bf16.mxu0 0
    %247 = vmatpush1.bf16.msra.mxu0 0
    %248 = vmatprep.subr.bf16.mxu0 0
    %249 = vmatpush1.bf16.msra.mxu0 0
    %250 = vmatprep.subr.bf16.mxu0 0
    %251 = vmatpush1.bf16.msra.mxu0 0
    %252 = vmatprep.mubr.bf16.mxu0 0
    %253 = vmatmul.mubr.bf16.gmra.mrb[0].mxu0 %v211
    %v254 = vpop.f32.mrb[0].mxu0
    %v255 = vadd.f32 0.0, %v254
    %v256 = vpop.f32.mrb[0].mxu0
    %v257 = vadd.f32 0.0, %v256
    %v258 = vpop.f32.mrb[0].mxu0
    %v259 = vpop.f32.mrb[0].mxu0
    %260 = vdwg.mxu0
    %v261 = vld [vmem:[#allocation7] sm:$0xff]
    %v262 = vld [vmem:[#allocation7 + $0x8] sm:$0xff]
    %v263 = vld [vmem:[#allocation7 + $0x10] sm:$0xff]
    %v264 = vld [vmem:[#allocation7 + $0x18] sm:$0xff]
    %v265 = vld [vmem:[#allocation7 + $0x20] sm:$0xff]
    %v266 = vld [vmem:[#allocation7 + $0x28] sm:$0xff]
    %v267 = vld [vmem:[#allocation7 + $0x30] sm:$0xff]
    %v268 = vld [vmem:[#allocation7 + $0x38] sm:$0xff]
    %v269 = vld [vmem:[#allocation7 + $0x40] sm:$0xff]
    %v279 = vunpack.c.l.b16 %v261
    %v280 = vunpack.c.h.b16 %v261
    %v281 = vunpack.c.l.b16 %v262
    %v282 = vunpack.c.h.b16 %v262
    %v283 = vunpack.c.l.b16 %v263
    %v284 = vunpack.c.h.b16 %v263
    %v285 = vunpack.c.l.b16 %v264
    %v286 = vunpack.c.h.b16 %v264
    %v287 = vunpack.c.l.b16 %v265
    %v288 = vunpack.c.h.b16 %v265
    %v289 = vunpack.c.l.b16 %v266
    %v290 = vunpack.c.h.b16 %v266
    %v291 = vunpack.c.l.b16 %v267
    %v292 = vunpack.c.h.b16 %v267
    %v293 = vunpack.c.l.b16 %v268
    %v294 = vunpack.c.h.b16 %v268
    %v295 = vunpack.c.l.b16 %v269
    %v296 = vunpack.c.h.b16 %v269
    %v297 = vpack.c.b16 %v281, %v279
    %v298 = vpack.c.b16 %v282, %v280
    %v299 = vpack.c.b16 %v285, %v283
    %v300 = vpack.c.b16 %v286, %v284
    %v301 = vpack.c.b16 %v289, %v287
    %v302 = vpack.c.b16 %v290, %v288
    %v303 = vpack.c.b16 %v293, %v291
    %v304 = vpack.c.b16 %v294, %v292
    %v305 = vpack.c.b16 %v295, %v295
    %v306 = vpack.c.b16 %v296, %v296
    %v316 = vsel %vm213, %v305, 0
    %v319 = vsel %vm213, %v306, 0
    %321 = vmatprep.subr.bf16.mxu0 %v298
    %322 = vmatpush1.bf16.msra.mxu0 %v297
    %323 = vmatprep.subr.bf16.mxu0 %v300
    %324 = vmatpush1.bf16.msra.mxu0 %v299
    %325 = vmatprep.subr.bf16.mxu0 %v302
    %326 = vmatpush1.bf16.msra.mxu0 %v301
    %327 = vmatprep.subr.bf16.mxu0 %v304
    %328 = vmatpush1.bf16.msra.mxu0 %v303
    %329 = vmatprep.subr.bf16.mxu0 %v319
    %330 = vmatpush1.bf16.msra.mxu0 %v316
    %331 = vmatprep.subr.bf16.mxu0 0
    %332 = vmatpush1.bf16.msra.mxu0 0
    %333 = vmatprep.subr.bf16.mxu0 0
    %334 = vmatpush1.bf16.msra.mxu0 0
    %335 = vmatprep.subr.bf16.mxu0 0
    %336 = vmatpush1.bf16.msra.mxu0 0
    %337 = vmatprep.subr.bf16.mxu0 0
    %338 = vmatpush1.bf16.msra.mxu0 0
    %339 = vmatprep.subr.bf16.mxu0 0
    %340 = vmatpush1.bf16.msra.mxu0 0
    %341 = vmatprep.subr.bf16.mxu0 0
    %342 = vmatpush1.bf16.msra.mxu0 0
    %343 = vmatprep.subr.bf16.mxu0 0
    %344 = vmatpush1.bf16.msra.mxu0 0
    %345 = vmatprep.subr.bf16.mxu0 0
    %346 = vmatpush1.bf16.msra.mxu0 0
    %347 = vmatprep.subr.bf16.mxu0 0
    %348 = vmatpush1.bf16.msra.mxu0 0
    %349 = vmatprep.subr.bf16.mxu0 0
    %350 = vmatpush1.bf16.msra.mxu0 0
    %351 = vmatprep.subr.bf16.mxu0 0
    %352 = vmatpush1.bf16.msra.mxu0 0
    %353 = vmatprep.mubr.bf16.mxu0 0
    %354 = vmatmul.mubr.bf16.gmra.mrb[0].mxu0 %v211
    %v355 = vpop.f32.mrb[0].mxu0
    %v356 = vadd.f32 0.0, %v355
    %v357 = vpop.f32.mrb[0].mxu0
    %v358 = vadd.f32 0.0, %v357
    %v359 = vpop.f32.mrb[0].mxu0
    %v360 = vpop.f32.mrb[0].mxu0
    %361 = vdwg.mxu0
    %v362 = vmax.f32 %v255, %v356
    %v363 = vmax.f32 %v257, %v358
    %v364 = vld [vmem:[%s3] sm:$0x3]
    %v366 = vlaneseq
    %v367 = vshrl.u32 %v366, 7
    %v368 = vsub.s32 0, %v367
    %v369 = vrot.slane %v364, %v368
    %v370 = vlaneseq
    %v371 = vshrl.u32 %v370, 7
    %v372 = vsub.s32 1, %v371
    %v373 = vrot.slane %v364, %v372
    %v376 = vadd.f32 %v362, %v369
    %v377 = vadd.f32 %v363, %v373
    %v378 = vmax.f32 %v376, 0.0
    %v379 = vmax.f32 %v377, 0.0
    %v380 = vpack.c.bf16 %v378, %v378
    %v381 = vpack.c.bf16 %v379, %v379
    %v382 = vld [vmem:[#allocation8] sm:$0xff]
    %v383 = vld [vmem:[#allocation8 + $0x8] sm:$0xff]
    %v384 = vld [vmem:[#allocation8 + $0x10] sm:$0xff]
    %v385 = vld [vmem:[#allocation8 + $0x18] sm:$0xff]
    %v386 = vld [vmem:[#allocation8 + $0x20] sm:$0xff]
    %v387 = vld [vmem:[#allocation8 + $0x28] sm:$0xff]
    %v388 = vld [vmem:[#allocation8 + $0x30] sm:$0xff]
    %v389 = vld [vmem:[#allocation8 + $0x38] sm:$0xff]
    %v390 = vld [vmem:[#allocation8 + $0x40] sm:$0xff]
    %v391 = vld [vmem:[#allocation8 + $0x48] sm:$0xff]
    %v392 = vld [vmem:[#allocation8 + $0x50] sm:$0xff]
    %v393 = vld [vmem:[#allocation8 + $0x58] sm:$0xff]
    %v394 = vld [vmem:[#allocation8 + $0x60] sm:$0xff]
    %v395 = vld [vmem:[#allocation8 + $0x68] sm:$0xff]
    %v396 = vld [vmem:[#allocation8 + $0x70] sm:$0xff]
    %v397 = vld [vmem:[#allocation8 + $0x78] sm:$0xff]
    %v398 = vld [vmem:[#allocation8 + $0x80] sm:$0xff]
    %v399 = vld [vmem:[#allocation8 + $0x88] sm:$0xff]
    %v400 = vld [vmem:[#allocation8 + $0x90] sm:$0xff]
    %v401 = vld [vmem:[#allocation8 + $0x98] sm:$0xff]
    %v402 = vld [vmem:[#allocation8 + $0xa0] sm:$0xff]
    %v403 = vld [vmem:[#allocation8 + $0xa8] sm:$0xff]
    %v404 = vld [vmem:[#allocation8 + $0xb0] sm:$0xff]
    %v405 = vld [vmem:[#allocation8 + $0xb8] sm:$0xff]
    %v430 = vunpack.c.l.b16 %v382
    %v431 = vunpack.c.h.b16 %v382
    %v432 = vunpack.c.l.b16 %v383
    %v433 = vunpack.c.h.b16 %v383
    %v434 = vunpack.c.l.b16 %v384
    %v435 = vunpack.c.h.b16 %v384
    %v436 = vunpack.c.l.b16 %v385
    %v437 = vunpack.c.h.b16 %v385
    %v438 = vunpack.c.l.b16 %v386
    %v439 = vunpack.c.h.b16 %v386
    %v440 = vunpack.c.l.b16 %v387
    %v441 = vunpack.c.h.b16 %v387
    %v442 = vunpack.c.l.b16 %v388
    %v443 = vunpack.c.h.b16 %v388
    %v444 = vunpack.c.l.b16 %v389
    %v445 = vunpack.c.h.b16 %v389
    %v446 = vunpack.c.l.b16 %v390
    %v447 = vunpack.c.h.b16 %v390
    %v448 = vunpack.c.l.b16 %v391
    %v449 = vunpack.c.h.b16 %v391
    %v450 = vunpack.c.l.b16 %v392
    %v451 = vunpack.c.h.b16 %v392
    %v452 = vunpack.c.l.b16 %v393
    %v453 = vunpack.c.h.b16 %v393
    %v454 = vunpack.c.l.b16 %v394
    %v455 = vunpack.c.h.b16 %v394
    %v456 = vunpack.c.l.b16 %v395
    %v457 = vunpack.c.h.b16 %v395
    %v458 = vunpack.c.l.b16 %v396
    %v459 = vunpack.c.h.b16 %v396
    %v460 = vunpack.c.l.b16 %v397
    %v461 = vunpack.c.h.b16 %v397
    %v462 = vunpack.c.l.b16 %v398
    %v463 = vunpack.c.h.b16 %v398
    %v464 = vunpack.c.l.b16 %v399
    %v465 = vunpack.c.h.b16 %v399
    %v466 = vunpack.c.l.b16 %v400
    %v467 = vunpack.c.h.b16 %v400
    %v468 = vunpack.c.l.b16 %v401
    %v469 = vunpack.c.h.b16 %v401
    %v470 = vunpack.c.l.b16 %v402
    %v471 = vunpack.c.h.b16 %v402
    %v472 = vunpack.c.l.b16 %v403
    %v473 = vunpack.c.h.b16 %v403
    %v474 = vunpack.c.l.b16 %v404
    %v475 = vunpack.c.h.b16 %v404
    %v476 = vunpack.c.l.b16 %v405
    %v477 = vunpack.c.h.b16 %v405
    %v478 = vpack.c.b16 %v432, %v430
    %v479 = vpack.c.b16 %v433, %v431
    %v480 = vpack.c.b16 %v436, %v434
    %v481 = vpack.c.b16 %v437, %v435
    %v482 = vpack.c.b16 %v440, %v438
    %v483 = vpack.c.b16 %v441, %v439
    %v484 = vpack.c.b16 %v444, %v442
    %v485 = vpack.c.b16 %v445, %v443
    %v486 = vpack.c.b16 %v448, %v446
    %v487 = vpack.c.b16 %v449, %v447
    %v488 = vpack.c.b16 %v452, %v450
    %v489 = vpack.c.b16 %v453, %v451
    %v490 = vpack.c.b16 %v456, %v454
    %v491 = vpack.c.b16 %v457, %v455
    %v492 = vpack.c.b16 %v460, %v458
    %v493 = vpack.c.b16 %v461, %v459
    %v494 = vpack.c.b16 %v464, %v462
    %v495 = vpack.c.b16 %v465, %v463
    %v496 = vpack.c.b16 %v468, %v466
    %v497 = vpack.c.b16 %v469, %v467
    %v498 = vpack.c.b16 %v472, %v470
    %v499 = vpack.c.b16 %v473, %v471
    %v500 = vpack.c.b16 %v476, %v474
    %v501 = vpack.c.b16 %v477, %v475
    %vm526 = vcmask 523264
    %v528 = vsel %vm526, %v381, 0
    %530 = vmatprep.subr.bf16.mxu0 %v479
    %531 = vmatpush1.bf16.msra.mxu0 %v478
    %532 = vmatprep.subr.bf16.mxu0 %v481
    %533 = vmatpush1.bf16.msra.mxu0 %v480
    %534 = vmatprep.subr.bf16.mxu0 %v483
    %535 = vmatpush1.bf16.msra.mxu0 %v482
    %536 = vmatprep.subr.bf16.mxu0 %v485
    %537 = vmatpush1.bf16.msra.mxu0 %v484
    %538 = vmatprep.subr.bf16.mxu0 %v487
    %539 = vmatpush1.bf16.msra.mxu0 %v486
    %540 = vmatprep.subr.bf16.mxu0 %v489
    %541 = vmatpush1.bf16.msra.mxu0 %v488
    %542 = vmatprep.subr.bf16.mxu0 %v491
    %543 = vmatpush1.bf16.msra.mxu0 %v490
    %544 = vmatprep.subr.bf16.mxu0 %v493
    %545 = vmatpush1.bf16.msra.mxu0 %v492
    %546 = vmatprep.subr.bf16.mxu0 %v495
    %547 = vmatpush1.bf16.msra.mxu0 %v494
    %548 = vmatprep.subr.bf16.mxu0 %v497
    %549 = vmatpush1.bf16.msra.mxu0 %v496
    %550 = vmatprep.subr.bf16.mxu0 %v499
    %551 = vmatpush1.bf16.msra.mxu0 %v498
    %552 = vmatprep.subr.bf16.mxu0 %v501
    %553 = vmatpush1.bf16.msra.mxu0 %v500
    %554 = vmatprep.subr.bf16.mxu0 0
    %555 = vmatpush1.bf16.msra.mxu0 0
    %556 = vmatprep.subr.bf16.mxu0 0
    %557 = vmatpush1.bf16.msra.mxu0 0
    %558 = vmatprep.subr.bf16.mxu0 0
    %559 = vmatpush1.bf16.msra.mxu0 0
    %560 = vmatprep.subr.bf16.mxu0 0
    %561 = vmatpush1.bf16.msra.mxu0 0
    %562 = vmatprep.mubr.bf16.mxu0 %v528
    %563 = vmatmul.mubr.bf16.gmra.mrb[0].mxu0 %v380
    %v564 = vpop.f32.mrb[0].mxu0
    %v565 = vadd.f32 0.0, %v564
    %v566 = vpop.f32.mrb[0].mxu0
    %v567 = vadd.f32 0.0, %v566
    %v568 = vpop.f32.mrb[0].mxu0
    %v569 = vpop.f32.mrb[0].mxu0
    %570 = vdwg.mxu0
    %v571 = vld [vmem:[#allocation10] sm:$0xff]
    %v572 = vld [vmem:[#allocation10 + $0x8] sm:$0xff]
    %v573 = vld [vmem:[#allocation10 + $0x10] sm:$0xff]
    %v574 = vld [vmem:[#allocation10 + $0x18] sm:$0xff]
    %v575 = vld [vmem:[#allocation10 + $0x20] sm:$0xff]
    %v576 = vld [vmem:[#allocation10 + $0x28] sm:$0xff]
    %v577 = vld [vmem:[#allocation10 + $0x30] sm:$0xff]
    %v578 = vld [vmem:[#allocation10 + $0x38] sm:$0xff]
    %v579 = vld [vmem:[#allocation10 + $0x40] sm:$0xff]
    %v580 = vld [vmem:[#allocation10 + $0x48] sm:$0xff]
    %v581 = vld [vmem:[#allocation10 + $0x50] sm:$0xff]
    %v582 = vld [vmem:[#allocation10 + $0x58] sm:$0xff]
    %v583 = vld [vmem:[#allocation10 + $0x60] sm:$0xff]
    %v584 = vld [vmem:[#allocation10 + $0x68] sm:$0xff]
    %v585 = vld [vmem:[#allocation10 + $0x70] sm:$0xff]
    %v586 = vld [vmem:[#allocation10 + $0x78] sm:$0xff]
    %v587 = vld [vmem:[#allocation10 + $0x80] sm:$0xff]
    %v588 = vld [vmem:[#allocation10 + $0x88] sm:$0xff]
    %v589 = vld [vmem:[#allocation10 + $0x90] sm:$0xff]
    %v590 = vld [vmem:[#allocation10 + $0x98] sm:$0xff]
    %v591 = vld [vmem:[#allocation10 + $0xa0] sm:$0xff]
    %v592 = vld [vmem:[#allocation10 + $0xa8] sm:$0xff]
    %v593 = vld [vmem:[#allocation10 + $0xb0] sm:$0xff]
    %v594 = vld [vmem:[#allocation10 + $0xb8] sm:$0xff]
    %v619 = vunpack.c.l.b16 %v571
    %v620 = vunpack.c.h.b16 %v571
    %v621 = vunpack.c.l.b16 %v572
    %v622 = vunpack.c.h.b16 %v572
    %v623 = vunpack.c.l.b16 %v573
    %v624 = vunpack.c.h.b16 %v573
    %v625 = vunpack.c.l.b16 %v574
    %v626 = vunpack.c.h.b16 %v574
    %v627 = vunpack.c.l.b16 %v575
    %v628 = vunpack.c.h.b16 %v575
    %v629 = vunpack.c.l.b16 %v576
    %v630 = vunpack.c.h.b16 %v576
    %v631 = vunpack.c.l.b16 %v577
    %v632 = vunpack.c.h.b16 %v577
    %v633 = vunpack.c.l.b16 %v578
    %v634 = vunpack.c.h.b16 %v578
    %v635 = vunpack.c.l.b16 %v579
    %v636 = vunpack.c.h.b16 %v579
    %v637 = vunpack.c.l.b16 %v580
    %v638 = vunpack.c.h.b16 %v580
    %v639 = vunpack.c.l.b16 %v581
    %v640 = vunpack.c.h.b16 %v581
    %v641 = vunpack.c.l.b16 %v582
    %v642 = vunpack.c.h.b16 %v582
    %v643 = vunpack.c.l.b16 %v583
    %v644 = vunpack.c.h.b16 %v583
    %v645 = vunpack.c.l.b16 %v584
    %v646 = vunpack.c.h.b16 %v584
    %v647 = vunpack.c.l.b16 %v585
    %v648 = vunpack.c.h.b16 %v585
    %v649 = vunpack.c.l.b16 %v586
    %v650 = vunpack.c.h.b16 %v586
    %v651 = vunpack.c.l.b16 %v587
    %v652 = vunpack.c.h.b16 %v587
    %v653 = vunpack.c.l.b16 %v588
    %v654 = vunpack.c.h.b16 %v588
    %v655 = vunpack.c.l.b16 %v589
    %v656 = vunpack.c.h.b16 %v589
    %v657 = vunpack.c.l.b16 %v590
    %v658 = vunpack.c.h.b16 %v590
    %v659 = vunpack.c.l.b16 %v591
    %v660 = vunpack.c.h.b16 %v591
    %v661 = vunpack.c.l.b16 %v592
    %v662 = vunpack.c.h.b16 %v592
    %v663 = vunpack.c.l.b16 %v593
    %v664 = vunpack.c.h.b16 %v593
    %v665 = vunpack.c.l.b16 %v594
    %v666 = vunpack.c.h.b16 %v594
    %v667 = vpack.c.b16 %v621, %v619
    %v668 = vpack.c.b16 %v622, %v620
    %v669 = vpack.c.b16 %v625, %v623
    %v670 = vpack.c.b16 %v626, %v624
    %v671 = vpack.c.b16 %v629, %v627
    %v672 = vpack.c.b16 %v630, %v628
    %v673 = vpack.c.b16 %v633, %v631
    %v674 = vpack.c.b16 %v634, %v632
    %v675 = vpack.c.b16 %v637, %v635
    %v676 = vpack.c.b16 %v638, %v636
    %v677 = vpack.c.b16 %v641, %v639
    %v678 = vpack.c.b16 %v642, %v640
    %v679 = vpack.c.b16 %v645, %v643
    %v680 = vpack.c.b16 %v646, %v644
    %v681 = vpack.c.b16 %v649, %v647
    %v682 = vpack.c.b16 %v650, %v648
    %v683 = vpack.c.b16 %v653, %v651
    %v684 = vpack.c.b16 %v654, %v652
    %v685 = vpack.c.b16 %v657, %v655
    %v686 = vpack.c.b16 %v658, %v656
    %v687 = vpack.c.b16 %v661, %v659
    %v688 = vpack.c.b16 %v662, %v660
    %v689 = vpack.c.b16 %v665, %v663
    %v690 = vpack.c.b16 %v666, %v664
    %715 = vmatprep.subr.bf16.mxu0 %v668
    %716 = vmatpush1.bf16.msra.mxu0 %v667
    %717 = vmatprep.subr.bf16.mxu0 %v670
    %718 = vmatpush1.bf16.msra.mxu0 %v669
    %719 = vmatprep.subr.bf16.mxu0 %v672
    %720 = vmatpush1.bf16.msra.mxu0 %v671
    %721 = vmatprep.subr.bf16.mxu0 %v674
    %722 = vmatpush1.bf16.msra.mxu0 %v673
    %723 = vmatprep.subr.bf16.mxu0 %v676
    %724 = vmatpush1.bf16.msra.mxu0 %v675
    %725 = vmatprep.subr.bf16.mxu0 %v678
    %726 = vmatpush1.bf16.msra.mxu0 %v677
    %727 = vmatprep.subr.bf16.mxu0 %v680
    %728 = vmatpush1.bf16.msra.mxu0 %v679
    %729 = vmatprep.subr.bf16.mxu0 %v682
    %730 = vmatpush1.bf16.msra.mxu0 %v681
    %731 = vmatprep.subr.bf16.mxu0 %v684
    %732 = vmatpush1.bf16.msra.mxu0 %v683
    %733 = vmatprep.subr.bf16.mxu0 %v686
    %734 = vmatpush1.bf16.msra.mxu0 %v685
    %735 = vmatprep.subr.bf16.mxu0 %v688
    %736 = vmatpush1.bf16.msra.mxu0 %v687
    %737 = vmatprep.subr.bf16.mxu0 %v690
    %738 = vmatpush1.bf16.msra.mxu0 %v689
    %739 = vmatprep.subr.bf16.mxu0 0
    %740 = vmatpush1.bf16.msra.mxu0 0
    %741 = vmatprep.subr.bf16.mxu0 0
    %742 = vmatpush1.bf16.msra.mxu0 0
    %743 = vmatprep.subr.bf16.mxu0 0
    %744 = vmatpush1.bf16.msra.mxu0 0
    %745 = vmatprep.subr.bf16.mxu0 0
    %746 = vmatpush1.bf16.msra.mxu0 0
    %747 = vmatprep.mubr.bf16.mxu0 %v528
    %748 = vmatmul.mubr.bf16.gmra.mrb[0].mxu0 %v380
    %v749 = vpop.f32.mrb[0].mxu0
    %v750 = vadd.f32 0.0, %v749
    %v751 = vpop.f32.mrb[0].mxu0
    %v752 = vadd.f32 0.0, %v751
    %v753 = vpop.f32.mrb[0].mxu0
    %v754 = vpop.f32.mrb[0].mxu0
    %755 = vdwg.mxu0
    %v756 = vmax.f32 %v565, %v750
    %v757 = vmax.f32 %v567, %v752
    %v758 = vld [vmem:[%s6] sm:$0x3]
    %v760 = vlaneseq
    %v761 = vshrl.u32 %v760, 7
    %v762 = vsub.s32 0, %v761
    %v763 = vrot.slane %v758, %v762
    %v764 = vlaneseq
    %v765 = vshrl.u32 %v764, 7
    %v766 = vsub.s32 1, %v765
    %v767 = vrot.slane %v758, %v766
    %v770 = vadd.f32 %v756, %v763
    %v771 = vadd.f32 %v757, %v767
    %v772 = vmax.f32 %v770, 0.0
    %v773 = vmax.f32 %v771, 0.0
    %v774 = vpack.c.bf16 %v772, %v772
    %v775 = vpack.c.bf16 %v773, %v773
    %v776 = vld [vmem:[#allocation11] sm:$0xff]
    %v777 = vld [vmem:[#allocation11 + $0x8] sm:$0xf]
    %v778 = vld [vmem:[#allocation11 + $0xc] sm:$0xff]
    %v779 = vld [vmem:[#allocation11 + $0x14] sm:$0xf]
    %v780 = vld [vmem:[#allocation11 + $0x18] sm:$0xff]
    %v781 = vld [vmem:[#allocation11 + $0x20] sm:$0xf]
    %v782 = vld [vmem:[#allocation11 + $0x24] sm:$0xff]
    %v783 = vld [vmem:[#allocation11 + $0x2c] sm:$0xf]
    %v784 = vld [vmem:[#allocation11 + $0x30] sm:$0xff]
    %v785 = vld [vmem:[#allocation11 + $0x38] sm:$0xf]
    %v786 = vld [vmem:[#allocation11 + $0x3c] sm:$0xff]
    %v787 = vld [vmem:[#allocation11 + $0x44] sm:$0xf]
    %v788 = vld [vmem:[#allocation11 + $0x48] sm:$0xff]
    %v789 = vld [vmem:[#allocation11 + $0x50] sm:$0xf]
    %v790 = vld [vmem:[#allocation11 + $0x54] sm:$0xff]
    %v791 = vld [vmem:[#allocation11 + $0x5c] sm:$0xf]
    %v792 = vld [vmem:[#allocation11 + $0x60] sm:$0xff]
    %v793 = vld [vmem:[#allocation11 + $0x68] sm:$0xf]
    %v794 = vld [vmem:[#allocation11 + $0x6c] sm:$0xff]
    %v795 = vld [vmem:[#allocation11 + $0x74] sm:$0xf]
    %v796 = vld [vmem:[#allocation11 + $0x78] sm:$0xff]
    %v797 = vld [vmem:[#allocation11 + $0x80] sm:$0xf]
    %v798 = vld [vmem:[#allocation11 + $0x84] sm:$0xff]
    %v799 = vld [vmem:[#allocation11 + $0x8c] sm:$0xf]
    %v800 = vld [vmem:[#allocation11 + $0x90] sm:$0xff]
    %v801 = vld [vmem:[#allocation11 + $0x98] sm:$0xf]
    %v802 = vld [vmem:[#allocation11 + $0x9c] sm:$0xff]
    %v803 = vld [vmem:[#allocation11 + $0xa4] sm:$0xf]
    %v804 = vld [vmem:[#allocation11 + $0xa8] sm:$0xff]
    %v805 = vld [vmem:[#allocation11 + $0xb0] sm:$0xf]
    %v806 = vld [vmem:[#allocation11 + $0xb4] sm:$0xff]
    %v807 = vld [vmem:[#allocation11 + $0xbc] sm:$0xf]
    %v808 = vld [vmem:[#allocation11 + $0xc0] sm:$0xff]
    %v809 = vld [vmem:[#allocation11 + $0xc8] sm:$0xf]
    %v810 = vld [vmem:[#allocation11 + $0xcc] sm:$0xff]
    %v811 = vld [vmem:[#allocation11 + $0xd4] sm:$0xf]
    %v812 = vld [vmem:[#allocation11 + $0xd8] sm:$0xff]
    %v813 = vld [vmem:[#allocation11 + $0xe0] sm:$0xf]
    %v814 = vld [vmem:[#allocation11 + $0xe4] sm:$0xff]
    %v815 = vld [vmem:[#allocation11 + $0xec] sm:$0xf]
    %v816 = vld [vmem:[#allocation11 + $0xf0] sm:$0xff]
    %v817 = vld [vmem:[#allocation11 + $0xf8] sm:$0xf]
    %v818 = vld [vmem:[#allocation11 + $0xfc] sm:$0xff]
    %v819 = vld [vmem:[#allocation11 + $0x104] sm:$0xf]
    %v820 = vld [vmem:[#allocation11 + $0x108] sm:$0xff]
    %v821 = vld [vmem:[#allocation11 + $0x110] sm:$0xf]
    %v822 = vld [vmem:[#allocation11 + $0x114] sm:$0xff]
    %v823 = vld [vmem:[#allocation11 + $0x11c] sm:$0xf]
    %v824 = vld [vmem:[%s8] sm:$0x7]
    %v826 = vlaneseq
    %v827 = vshrl.u32 %v826, 7
    %v828 = vsub.s32 0, %v827
    %v829 = vrot.slane %v824, %v828
    %v830 = vlaneseq
    %v831 = vshrl.u32 %v830, 7
    %v832 = vsub.s32 1, %v831
    %v833 = vrot.slane %v824, %v832
    %v834 = vlaneseq
    %v835 = vshrl.u32 %v834, 7
    %v836 = vsub.s32 2, %v835
    %v837 = vrot.slane %v824, %v836
    %v889 = vunpack.c.l.b16 %v776
    %v890 = vunpack.c.h.b16 %v776
    %v891 = vunpack.c.l.b16 %v777
    %v892 = vunpack.c.l.b16 %v778
    %v893 = vunpack.c.h.b16 %v778
    %v894 = vunpack.c.l.b16 %v779
    %v895 = vunpack.c.l.b16 %v780
    %v896 = vunpack.c.h.b16 %v780
    %v897 = vunpack.c.l.b16 %v781
    %v898 = vunpack.c.l.b16 %v782
    %v899 = vunpack.c.h.b16 %v782
    %v900 = vunpack.c.l.b16 %v783
    %v901 = vunpack.c.l.b16 %v784
    %v902 = vunpack.c.h.b16 %v784
    %v903 = vunpack.c.l.b16 %v785
    %v904 = vunpack.c.l.b16 %v786
    %v905 = vunpack.c.h.b16 %v786
    %v906 = vunpack.c.l.b16 %v787
    %v907 = vunpack.c.l.b16 %v788
    %v908 = vunpack.c.h.b16 %v788
    %v909 = vunpack.c.l.b16 %v789
    %v910 = vunpack.c.l.b16 %v790
    %v911 = vunpack.c.h.b16 %v790
    %v912 = vunpack.c.l.b16 %v791
    %v913 = vunpack.c.l.b16 %v792
    %v914 = vunpack.c.h.b16 %v792
    %v915 = vunpack.c.l.b16 %v793
    %v916 = vunpack.c.l.b16 %v794
    %v917 = vunpack.c.h.b16 %v794
    %v918 = vunpack.c.l.b16 %v795
    %v919 = vunpack.c.l.b16 %v796
    %v920 = vunpack.c.h.b16 %v796
    %v921 = vunpack.c.l.b16 %v797
    %v922 = vunpack.c.l.b16 %v798
    %v923 = vunpack.c.h.b16 %v798
    %v924 = vunpack.c.l.b16 %v799
    %v925 = vunpack.c.l.b16 %v800
    %v926 = vunpack.c.h.b16 %v800
    %v927 = vunpack.c.l.b16 %v801
    %v928 = vunpack.c.l.b16 %v802
    %v929 = vunpack.c.h.b16 %v802
    %v930 = vunpack.c.l.b16 %v803
    %v931 = vunpack.c.l.b16 %v804
    %v932 = vunpack.c.h.b16 %v804
    %v933 = vunpack.c.l.b16 %v805
    %v934 = vunpack.c.l.b16 %v806
    %v935 = vunpack.c.h.b16 %v806
    %v936 = vunpack.c.l.b16 %v807
    %v937 = vunpack.c.l.b16 %v808
    %v938 = vunpack.c.h.b16 %v808
    %v939 = vunpack.c.l.b16 %v809
    %v940 = vunpack.c.l.b16 %v810
    %v941 = vunpack.c.h.b16 %v810
    %v942 = vunpack.c.l.b16 %v811
    %v943 = vunpack.c.l.b16 %v812
    %v944 = vunpack.c.h.b16 %v812
    %v945 = vunpack.c.l.b16 %v813
    %v946 = vunpack.c.l.b16 %v814
    %v947 = vunpack.c.h.b16 %v814
    %v948 = vunpack.c.l.b16 %v815
    %v949 = vunpack.c.l.b16 %v816
    %v950 = vunpack.c.h.b16 %v816
    %v951 = vunpack.c.l.b16 %v817
    %v952 = vunpack.c.l.b16 %v818
    %v953 = vunpack.c.h.b16 %v818
    %v954 = vunpack.c.l.b16 %v819
    %v955 = vunpack.c.l.b16 %v820
    %v956 = vunpack.c.h.b16 %v820
    %v957 = vunpack.c.l.b16 %v821
    %v958 = vunpack.c.l.b16 %v822
    %v959 = vunpack.c.h.b16 %v822
    %v960 = vunpack.c.l.b16 %v823
    %v961 = vpack.c.b16 %v892, %v889
    %v962 = vpack.c.b16 %v893, %v890
    %v963 = vpack.c.b16 %v894, %v891
    %v964 = vpack.c.b16 %v898, %v895
    %v965 = vpack.c.b16 %v899, %v896
    %v966 = vpack.c.b16 %v900, %v897
    %v967 = vpack.c.b16 %v904, %v901
    %v968 = vpack.c.b16 %v905, %v902
    %v969 = vpack.c.b16 %v906, %v903
    %v970 = vpack.c.b16 %v910, %v907
    %v971 = vpack.c.b16 %v911, %v908
    %v972 = vpack.c.b16 %v912, %v909
    %v973 = vpack.c.b16 %v916, %v913
    %v974 = vpack.c.b16 %v917, %v914
    %v975 = vpack.c.b16 %v918, %v915
    %v976 = vpack.c.b16 %v922, %v919
    %v977 = vpack.c.b16 %v923, %v920
    %v978 = vpack.c.b16 %v924, %v921
    %v979 = vpack.c.b16 %v928, %v925
    %v980 = vpack.c.b16 %v929, %v926
    %v981 = vpack.c.b16 %v930, %v927
    %v982 = vpack.c.b16 %v934, %v931
    %v983 = vpack.c.b16 %v935, %v932
    %v984 = vpack.c.b16 %v936, %v933
    %v985 = vpack.c.b16 %v940, %v937
    %v986 = vpack.c.b16 %v941, %v938
    %v987 = vpack.c.b16 %v942, %v939
    %v988 = vpack.c.b16 %v946, %v943
    %v989 = vpack.c.b16 %v947, %v944
    %v990 = vpack.c.b16 %v948, %v945
    %v991 = vpack.c.b16 %v952, %v949
    %v992 = vpack.c.b16 %v953, %v950
    %v993 = vpack.c.b16 %v954, %v951
    %v994 = vpack.c.b16 %v958, %v955
    %v995 = vpack.c.b16 %v959, %v956
    %v996 = vpack.c.b16 %v960, %v957
    %v1034 = vsel %vm526, %v775, 0
    %1036 = vmatprep.subr.bf16.mxu0 %v962
    %1037 = vmatpush1.bf16.msra.mxu0 %v961
    %1038 = vmatprep.subr.bf16.mxu0 %v965
    %1039 = vmatpush1.bf16.msra.mxu0 %v964
    %1040 = vmatprep.subr.bf16.mxu0 %v968
    %1041 = vmatpush1.bf16.msra.mxu0 %v967
    %1042 = vmatprep.subr.bf16.mxu0 %v971
    %1043 = vmatpush1.bf16.msra.mxu0 %v970
    %1044 = vmatprep.subr.bf16.mxu0 %v974
    %1045 = vmatpush1.bf16.msra.mxu0 %v973
    %1046 = vmatprep.subr.bf16.mxu0 %v977
    %1047 = vmatpush1.bf16.msra.mxu0 %v976
    %1048 = vmatprep.subr.bf16.mxu0 %v980
    %1049 = vmatpush1.bf16.msra.mxu0 %v979
    %1050 = vmatprep.subr.bf16.mxu0 %v983
    %1051 = vmatpush1.bf16.msra.mxu0 %v982
    %1052 = vmatprep.subr.bf16.mxu0 %v986
    %1053 = vmatpush1.bf16.msra.mxu0 %v985
    %1054 = vmatprep.subr.bf16.mxu0 %v989
    %1055 = vmatpush1.bf16.msra.mxu0 %v988
    %1056 = vmatprep.subr.bf16.mxu0 %v992
    %1057 = vmatpush1.bf16.msra.mxu0 %v991
    %1058 = vmatprep.subr.bf16.mxu0 %v995
    %1059 = vmatpush1.bf16.msra.mxu0 %v994
    %1060 = vmatprep.subr.bf16.mxu0 0
    %1061 = vmatpush1.bf16.msra.mxu0 0
    %1062 = vmatprep.subr.bf16.mxu0 0
    %1063 = vmatpush1.bf16.msra.mxu0 0
    %1064 = vmatprep.subr.bf16.mxu0 0
    %1065 = vmatpush1.bf16.msra.mxu0 0
    %1066 = vmatprep.subr.bf16.mxu0 0
    %1067 = vmatpush1.bf16.msra.mxu0 0
    %1068 = vmatprep.mubr.bf16.mxu0 %v1034
    %1069 = vmatmul.mubr.bf16.gmra.mrb[0].mxu0 %v774
    %v1070 = vpop.f32.mrb[0].mxu0
    %v1071 = vadd.f32 %v829, %v1070
    %v1072 = vpop.f32.mrb[0].mxu0
    %v1073 = vadd.f32 %v833, %v1072
    %v1074 = vpop.f32.mrb[0].mxu0
    %v1075 = vpop.f32.mrb[0].mxu0
    %1076 = vdwg.mxu0
    %1077 = vmatprep.subr.bf16.mxu0 0
    %1078 = vmatpush1.bf16.msra.mxu0 %v963
    %1079 = vmatprep.subr.bf16.mxu0 0
    %1080 = vmatpush1.bf16.msra.mxu0 %v966
    %1081 = vmatprep.subr.bf16.mxu0 0
    %1082 = vmatpush1.bf16.msra.mxu0 %v969
    %1083 = vmatprep.subr.bf16.mxu0 0
    %1084 = vmatpush1.bf16.msra.mxu0 %v972
    %1085 = vmatprep.subr.bf16.mxu0 0
    %1086 = vmatpush1.bf16.msra.mxu0 %v975
    %1087 = vmatprep.subr.bf16.mxu0 0
    %1088 = vmatpush1.bf16.msra.mxu0 %v978
    %1089 = vmatprep.subr.bf16.mxu0 0
    %1090 = vmatpush1.bf16.msra.mxu0 %v981
    %1091 = vmatprep.subr.bf16.mxu0 0
    %1092 = vmatpush1.bf16.msra.mxu0 %v984
    %1093 = vmatprep.subr.bf16.mxu0 0
    %1094 = vmatpush1.bf16.msra.mxu0 %v987
    %1095 = vmatprep.subr.bf16.mxu0 0
    %1096 = vmatpush1.bf16.msra.mxu0 %v990
    %1097 = vmatprep.subr.bf16.mxu0 0
    %1098 = vmatpush1.bf16.msra.mxu0 %v993
    %1099 = vmatprep.subr.bf16.mxu0 0
    %1100 = vmatpush1.bf16.msra.mxu0 %v996
    %1101 = vmatprep.subr.bf16.mxu0 0
    %1102 = vmatpush1.bf16.msra.mxu0 0
    %1103 = vmatprep.subr.bf16.mxu0 0
    %1104 = vmatpush1.bf16.msra.mxu0 0
    %1105 = vmatprep.subr.bf16.mxu0 0
    %1106 = vmatpush1.bf16.msra.mxu0 0
    %1107 = vmatprep.subr.bf16.mxu0 0
    %1108 = vmatpush1.bf16.msra.mxu0 0
    %1109 = vmatprep.mubr.bf16.mxu0 %v1034
    %1110 = vmatmul.mubr.bf16.gmra.mrb[0].mxu0 %v774
    %v1111 = vpop.f32.mrb[0].mxu0
    %v1112 = vadd.f32 %v837, %v1111
    %v1113 = vpop.f32.mrb[0].mxu0
    %v1114 = vpop.f32.mrb[0].mxu0
    %v1115 = vpop.f32.mrb[0].mxu0
    %1116 = vdwg.mxu0
    %v1117 = vmax.f32 %v1071, 0.0
    %v1118 = vmax.f32 %v1073, 0.0
    %v1119 = vmax.f32 %v1112, 0.0
    %v1120 = vpack.c.bf16 %v1117, %v1117
    %v1121 = vpack.c.bf16 %v1118, %v1118
    %v1122 = vpack.c.bf16 %v1119, %v1119
    %v1123 = vld [vmem:[#allocation13] sm:$0xff]
    %v1124 = vld [vmem:[#allocation13 + $0x8] sm:$0xff]
    %v1125 = vld [vmem:[#allocation13 + $0x10] sm:$0xff]
    %v1126 = vld [vmem:[#allocation13 + $0x18] sm:$0xff]
    %v1127 = vld [vmem:[#allocation13 + $0x20] sm:$0xff]
    %v1128 = vld [vmem:[#allocation13 + $0x28] sm:$0xff]
    %v1129 = vld [vmem:[#allocation13 + $0x30] sm:$0xff]
    %v1130 = vld [vmem:[#allocation13 + $0x38] sm:$0xff]
    %v1131 = vld [vmem:[#allocation13 + $0x40] sm:$0xff]
    %v1132 = vld [vmem:[#allocation13 + $0x48] sm:$0xff]
    %v1133 = vld [vmem:[#allocation13 + $0x50] sm:$0xff]
    %v1134 = vld [vmem:[#allocation13 + $0x58] sm:$0xff]
    %v1135 = vld [vmem:[#allocation13 + $0x60] sm:$0xff]
    %v1136 = vld [vmem:[#allocation13 + $0x68] sm:$0xff]
    %v1137 = vld [vmem:[#allocation13 + $0x70] sm:$0xff]
    %v1138 = vld [vmem:[#allocation13 + $0x78] sm:$0xff]
    %v1139 = vld [vmem:[#allocation13 + $0x80] sm:$0xff]
    %v1140 = vld [vmem:[#allocation13 + $0x88] sm:$0xff]
    %v1141 = vld [vmem:[#allocation13 + $0x90] sm:$0xff]
    %v1142 = vld [vmem:[#allocation13 + $0x98] sm:$0xff]
    %v1143 = vld [vmem:[#allocation13 + $0xa0] sm:$0xff]
    %v1144 = vld [vmem:[#allocation13 + $0xa8] sm:$0xff]
    %v1145 = vld [vmem:[#allocation13 + $0xb0] sm:$0xff]
    %v1146 = vld [vmem:[#allocation13 + $0xb8] sm:$0xff]
    %v1147 = vld [vmem:[#allocation13 + $0xc0] sm:$0xff]
    %v1148 = vld [vmem:[#allocation13 + $0xc8] sm:$0xff]
    %v1149 = vld [vmem:[#allocation13 + $0xd0] sm:$0xff]
    %v1150 = vld [vmem:[#allocation13 + $0xd8] sm:$0xff]
    %v1151 = vld [vmem:[#allocation13 + $0xe0] sm:$0xff]
    %v1152 = vld [vmem:[#allocation13 + $0xe8] sm:$0xff]
    %v1153 = vld [vmem:[#allocation13 + $0xf0] sm:$0xff]
    %v1154 = vld [vmem:[#allocation13 + $0xf8] sm:$0xff]
    %v1155 = vld [vmem:[#allocation13 + $0x100] sm:$0xff]
    %v1156 = vld [vmem:[#allocation13 + $0x108] sm:$0xff]
    %v1157 = vld [vmem:[#allocation13 + $0x110] sm:$0xff]
    %v1158 = vld [vmem:[#allocation13 + $0x118] sm:$0xff]
    %v1159 = vld [vmem:[#allocation13 + $0x120] sm:$0xff]
    %v1160 = vld [vmem:[#allocation13 + $0x128] sm:$0xff]
    %v1161 = vld [vmem:[#allocation13 + $0x130] sm:$0xff]
    %v1162 = vld [vmem:[#allocation13 + $0x138] sm:$0xff]
    %v1163 = vld [vmem:[#allocation13 + $0x140] sm:$0xff]
    %v1164 = vld [vmem:[#allocation13 + $0x148] sm:$0xff]
    %v1165 = vld [vmem:[#allocation13 + $0x150] sm:$0xff]
    %v1166 = vld [vmem:[#allocation13 + $0x158] sm:$0xff]
    %v1167 = vld [vmem:[#allocation13 + $0x160] sm:$0xff]
    %v1168 = vld [vmem:[#allocation13 + $0x168] sm:$0xff]
    %v1169 = vld [vmem:[#allocation13 + $0x170] sm:$0xff]
    %v1170 = vld [vmem:[#allocation13 + $0x178] sm:$0xff]
    %v1171 = vld [vmem:[%s10] sm:$0x3]
    %v1173 = vlaneseq
    %v1174 = vshrl.u32 %v1173, 7
    %v1175 = vsub.s32 0, %v1174
    %v1176 = vrot.slane %v1171, %v1175
    %v1177 = vlaneseq
    %v1178 = vshrl.u32 %v1177, 7
    %v1179 = vsub.s32 1, %v1178
    %v1180 = vrot.slane %v1171, %v1179
    %v1231 = vunpack.c.l.b16 %v1123
    %v1232 = vunpack.c.h.b16 %v1123
    %v1233 = vunpack.c.l.b16 %v1124
    %v1234 = vunpack.c.h.b16 %v1124
    %v1235 = vunpack.c.l.b16 %v1125
    %v1236 = vunpack.c.h.b16 %v1125
    %v1237 = vunpack.c.l.b16 %v1126
    %v1238 = vunpack.c.h.b16 %v1126
    %v1239 = vunpack.c.l.b16 %v1127
    %v1240 = vunpack.c.h.b16 %v1127
    %v1241 = vunpack.c.l.b16 %v1128
    %v1242 = vunpack.c.h.b16 %v1128
    %v1243 = vunpack.c.l.b16 %v1129
    %v1244 = vunpack.c.h.b16 %v1129
    %v1245 = vunpack.c.l.b16 %v1130
    %v1246 = vunpack.c.h.b16 %v1130
    %v1247 = vunpack.c.l.b16 %v1131
    %v1248 = vunpack.c.h.b16 %v1131
    %v1249 = vunpack.c.l.b16 %v1132
    %v1250 = vunpack.c.h.b16 %v1132
    %v1251 = vunpack.c.l.b16 %v1133
    %v1252 = vunpack.c.h.b16 %v1133
    %v1253 = vunpack.c.l.b16 %v1134
    %v1254 = vunpack.c.h.b16 %v1134
    %v1255 = vunpack.c.l.b16 %v1135
    %v1256 = vunpack.c.h.b16 %v1135
    %v1257 = vunpack.c.l.b16 %v1136
    %v1258 = vunpack.c.h.b16 %v1136
    %v1259 = vunpack.c.l.b16 %v1137
    %v1260 = vunpack.c.h.b16 %v1137
    %v1261 = vunpack.c.l.b16 %v1138
    %v1262 = vunpack.c.h.b16 %v1138
    %v1263 = vunpack.c.l.b16 %v1139
    %v1264 = vunpack.c.h.b16 %v1139
    %v1265 = vunpack.c.l.b16 %v1140
    %v1266 = vunpack.c.h.b16 %v1140
    %v1267 = vunpack.c.l.b16 %v1141
    %v1268 = vunpack.c.h.b16 %v1141
    %v1269 = vunpack.c.l.b16 %v1142
    %v1270 = vunpack.c.h.b16 %v1142
    %v1271 = vunpack.c.l.b16 %v1143
    %v1272 = vunpack.c.h.b16 %v1143
    %v1273 = vunpack.c.l.b16 %v1144
    %v1274 = vunpack.c.h.b16 %v1144
    %v1275 = vunpack.c.l.b16 %v1145
    %v1276 = vunpack.c.h.b16 %v1145
    %v1277 = vunpack.c.l.b16 %v1146
    %v1278 = vunpack.c.h.b16 %v1146
    %v1279 = vunpack.c.l.b16 %v1147
    %v1280 = vunpack.c.h.b16 %v1147
    %v1281 = vunpack.c.l.b16 %v1148
    %v1282 = vunpack.c.h.b16 %v1148
    %v1283 = vunpack.c.l.b16 %v1149
    %v1284 = vunpack.c.h.b16 %v1149
    %v1285 = vunpack.c.l.b16 %v1150
    %v1286 = vunpack.c.h.b16 %v1150
    %v1287 = vunpack.c.l.b16 %v1151
    %v1288 = vunpack.c.h.b16 %v1151
    %v1289 = vunpack.c.l.b16 %v1152
    %v1290 = vunpack.c.h.b16 %v1152
    %v1291 = vunpack.c.l.b16 %v1153
    %v1292 = vunpack.c.h.b16 %v1153
    %v1293 = vunpack.c.l.b16 %v1154
    %v1294 = vunpack.c.h.b16 %v1154
    %v1295 = vunpack.c.l.b16 %v1155
    %v1296 = vunpack.c.h.b16 %v1155
    %v1297 = vunpack.c.l.b16 %v1156
    %v1298 = vunpack.c.h.b16 %v1156
    %v1299 = vunpack.c.l.b16 %v1157
    %v1300 = vunpack.c.h.b16 %v1157
    %v1301 = vunpack.c.l.b16 %v1158
    %v1302 = vunpack.c.h.b16 %v1158
    %v1303 = vunpack.c.l.b16 %v1159
    %v1304 = vunpack.c.h.b16 %v1159
    %v1305 = vunpack.c.l.b16 %v1160
    %v1306 = vunpack.c.h.b16 %v1160
    %v1307 = vunpack.c.l.b16 %v1161
    %v1308 = vunpack.c.h.b16 %v1161
    %v1309 = vunpack.c.l.b16 %v1162
    %v1310 = vunpack.c.h.b16 %v1162
    %v1311 = vunpack.c.l.b16 %v1163
    %v1312 = vunpack.c.h.b16 %v1163
    %v1313 = vunpack.c.l.b16 %v1164
    %v1314 = vunpack.c.h.b16 %v1164
    %v1315 = vunpack.c.l.b16 %v1165
    %v1316 = vunpack.c.h.b16 %v1165
    %v1317 = vunpack.c.l.b16 %v1166
    %v1318 = vunpack.c.h.b16 %v1166
    %v1319 = vunpack.c.l.b16 %v1167
    %v1320 = vunpack.c.h.b16 %v1167
    %v1321 = vunpack.c.l.b16 %v1168
    %v1322 = vunpack.c.h.b16 %v1168
    %v1323 = vunpack.c.l.b16 %v1169
    %v1324 = vunpack.c.h.b16 %v1169
    %v1325 = vunpack.c.l.b16 %v1170
    %v1326 = vunpack.c.h.b16 %v1170
    %v1327 = vpack.c.b16 %v1233, %v1231
    %v1328 = vpack.c.b16 %v1234, %v1232
    %v1329 = vpack.c.b16 %v1237, %v1235
    %v1330 = vpack.c.b16 %v1238, %v1236
    %v1331 = vpack.c.b16 %v1241, %v1239
    %v1332 = vpack.c.b16 %v1242, %v1240
    %v1333 = vpack.c.b16 %v1245, %v1243
    %v1334 = vpack.c.b16 %v1246, %v1244
    %v1335 = vpack.c.b16 %v1249, %v1247
    %v1336 = vpack.c.b16 %v1250, %v1248
    %v1337 = vpack.c.b16 %v1253, %v1251
    %v1338 = vpack.c.b16 %v1254, %v1252
    %v1339 = vpack.c.b16 %v1257, %v1255
    %v1340 = vpack.c.b16 %v1258, %v1256
    %v1341 = vpack.c.b16 %v1261, %v1259
    %v1342 = vpack.c.b16 %v1262, %v1260
    %v1343 = vpack.c.b16 %v1265, %v1263
    %v1344 = vpack.c.b16 %v1266, %v1264
    %v1345 = vpack.c.b16 %v1269, %v1267
    %v1346 = vpack.c.b16 %v1270, %v1268
    %v1347 = vpack.c.b16 %v1273, %v1271
    %v1348 = vpack.c.b16 %v1274, %v1272
    %v1349 = vpack.c.b16 %v1277, %v1275
    %v1350 = vpack.c.b16 %v1278, %v1276
    %v1351 = vpack.c.b16 %v1281, %v1279
    %v1352 = vpack.c.b16 %v1282, %v1280
    %v1353 = vpack.c.b16 %v1285, %v1283
    %v1354 = vpack.c.b16 %v1286, %v1284
    %v1355 = vpack.c.b16 %v1289, %v1287
    %v1356 = vpack.c.b16 %v1290, %v1288
    %v1357 = vpack.c.b16 %v1293, %v1291
    %v1358 = vpack.c.b16 %v1294, %v1292
    %v1359 = vpack.c.b16 %v1297, %v1295
    %v1360 = vpack.c.b16 %v1298, %v1296
    %v1361 = vpack.c.b16 %v1301, %v1299
    %v1362 = vpack.c.b16 %v1302, %v1300
    %v1363 = vpack.c.b16 %v1305, %v1303
    %v1364 = vpack.c.b16 %v1306, %v1304
    %v1365 = vpack.c.b16 %v1309, %v1307
    %v1366 = vpack.c.b16 %v1310, %v1308
    %v1367 = vpack.c.b16 %v1313, %v1311
    %v1368 = vpack.c.b16 %v1314, %v1312
    %v1369 = vpack.c.b16 %v1317, %v1315
    %v1370 = vpack.c.b16 %v1318, %v1316
    %v1371 = vpack.c.b16 %v1321, %v1319
    %v1372 = vpack.c.b16 %v1322, %v1320
    %v1373 = vpack.c.b16 %v1325, %v1323
    %v1374 = vpack.c.b16 %v1326, %v1324
    %1423 = vmatprep.subr.bf16.mxu0 %v1328
    %1424 = vmatpush1.bf16.msra.mxu0 %v1327
    %1425 = vmatprep.subr.bf16.mxu0 %v1330
    %1426 = vmatpush1.bf16.msra.mxu0 %v1329
    %1427 = vmatprep.subr.bf16.mxu0 %v1332
    %1428 = vmatpush1.bf16.msra.mxu0 %v1331
    %1429 = vmatprep.subr.bf16.mxu0 %v1334
    %1430 = vmatpush1.bf16.msra.mxu0 %v1333
    %1431 = vmatprep.subr.bf16.mxu0 %v1336
    %1432 = vmatpush1.bf16.msra.mxu0 %v1335
    %1433 = vmatprep.subr.bf16.mxu0 %v1338
    %1434 = vmatpush1.bf16.msra.mxu0 %v1337
    %1435 = vmatprep.subr.bf16.mxu0 %v1340
    %1436 = vmatpush1.bf16.msra.mxu0 %v1339
    %1437 = vmatprep.subr.bf16.mxu0 %v1342
    %1438 = vmatpush1.bf16.msra.mxu0 %v1341
    %1439 = vmatprep.subr.bf16.mxu0 %v1344
    %1440 = vmatpush1.bf16.msra.mxu0 %v1343
    %1441 = vmatprep.subr.bf16.mxu0 %v1346
    %1442 = vmatpush1.bf16.msra.mxu0 %v1345
    %1443 = vmatprep.subr.bf16.mxu0 %v1348
    %1444 = vmatpush1.bf16.msra.mxu0 %v1347
    %1445 = vmatprep.subr.bf16.mxu0 %v1350
    %1446 = vmatpush1.bf16.msra.mxu0 %v1349
    %1447 = vmatprep.subr.bf16.mxu0 %v1352
    %1448 = vmatpush1.bf16.msra.mxu0 %v1351
    %1449 = vmatprep.subr.bf16.mxu0 %v1354
    %1450 = vmatpush1.bf16.msra.mxu0 %v1353
    %1451 = vmatprep.subr.bf16.mxu0 %v1356
    %1452 = vmatpush1.bf16.msra.mxu0 %v1355
    %1453 = vmatprep.subr.bf16.mxu0 %v1358
    %1454 = vmatpush1.bf16.msra.mxu0 %v1357
    %1455 = vmatprep.mubr.bf16.mxu0 %v1121
    %1456 = vmatmul.mubr.bf16.gmra.mrb[0].mxu0 %v1120
    %v1457 = vpop.f32.mrb[0].mxu0
    %v1458 = vadd.f32 %v1176, %v1457
    %v1459 = vpop.f32.mrb[0].mxu0
    %v1460 = vadd.f32 %v1180, %v1459
    %v1461 = vpop.f32.mrb[0].mxu0
    %v1462 = vpop.f32.mrb[0].mxu0
    %1463 = vdwg.mxu0
    %1464 = vmatprep.subr.bf16.mxu0 %v1360
    %1465 = vmatpush1.bf16.msra.mxu0 %v1359
    %1466 = vmatprep.subr.bf16.mxu0 %v1362
    %1467 = vmatpush1.bf16.msra.mxu0 %v1361
    %1468 = vmatprep.subr.bf16.mxu0 %v1364
    %1469 = vmatpush1.bf16.msra.mxu0 %v1363
    %1470 = vmatprep.subr.bf16.mxu0 %v1366
    %1471 = vmatpush1.bf16.msra.mxu0 %v1365
    %1472 = vmatprep.subr.bf16.mxu0 %v1368
    %1473 = vmatpush1.bf16.msra.mxu0 %v1367
    %1474 = vmatprep.subr.bf16.mxu0 %v1370
    %1475 = vmatpush1.bf16.msra.mxu0 %v1369
    %1476 = vmatprep.subr.bf16.mxu0 %v1372
    %1477 = vmatpush1.bf16.msra.mxu0 %v1371
    %1478 = vmatprep.subr.bf16.mxu0 %v1374
    %1479 = vmatpush1.bf16.msra.mxu0 %v1373
    %1480 = vmatprep.subr.bf16.mxu0 0
    %1481 = vmatpush1.bf16.msra.mxu0 0
    %1482 = vmatprep.subr.bf16.mxu0 0
    %1483 = vmatpush1.bf16.msra.mxu0 0
    %1484 = vmatprep.subr.bf16.mxu0 0
    %1485 = vmatpush1.bf16.msra.mxu0 0
    %1486 = vmatprep.subr.bf16.mxu0 0
    %1487 = vmatpush1.bf16.msra.mxu0 0
    %1488 = vmatprep.subr.bf16.mxu0 0
    %1489 = vmatpush1.bf16.msra.mxu0 0
    %1490 = vmatprep.subr.bf16.mxu0 0
    %1491 = vmatpush1.bf16.msra.mxu0 0
    %1492 = vmatprep.subr.bf16.mxu0 0
    %1493 = vmatpush1.bf16.msra.mxu0 0
    %1494 = vmatprep.subr.bf16.mxu0 0
    %1495 = vmatpush1.bf16.msra.mxu0 0
    %1496 = vmatprep.mubr.bf16.mxu0 0
    %1497 = vmatmul.mubr.bf16.gmra.mrb[0].mxu0 %v1122
    %v1498 = vpop.f32.mrb[0].mxu0
    %v1499 = vadd.f32 %v1458, %v1498
    %v1500 = vpop.f32.mrb[0].mxu0
    %v1501 = vadd.f32 %v1460, %v1500
    %v1502 = vpop.f32.mrb[0].mxu0
    %v1503 = vpop.f32.mrb[0].mxu0
    %1504 = vdwg.mxu0
    %v1505 = vmax.f32 %v1499, 0.0
    %v1506 = vmax.f32 %v1501, 0.0
    %v1507 = vpack.c.bf16 %v1505, %v1505
    %v1508 = vpack.c.bf16 %v1506, %v1506
    %v1509 = vld [vmem:[#allocation14] sm:$0xf]
    %v1510 = vld [vmem:[#allocation14 + $0x4] sm:$0xf]
    %v1511 = vld [vmem:[#allocation14 + $0x8] sm:$0xf]
    %v1512 = vld [vmem:[#allocation14 + $0xc] sm:$0xf]
    %v1513 = vld [vmem:[#allocation14 + $0x10] sm:$0xf]
    %v1514 = vld [vmem:[#allocation14 + $0x14] sm:$0xf]
    %v1515 = vld [vmem:[#allocation14 + $0x18] sm:$0xf]
    %v1516 = vld [vmem:[#allocation14 + $0x1c] sm:$0xf]
    %v1517 = vld [vmem:[#allocation14 + $0x20] sm:$0xf]
    %v1518 = vld [vmem:[#allocation14 + $0x24] sm:$0xf]
    %v1519 = vld [vmem:[#allocation14 + $0x28] sm:$0xf]
    %v1520 = vld [vmem:[#allocation14 + $0x2c] sm:$0xf]
    %v1521 = vld [vmem:[#allocation14 + $0x30] sm:$0xf]
    %v1522 = vld [vmem:[#allocation14 + $0x34] sm:$0xf]
    %v1523 = vld [vmem:[#allocation14 + $0x38] sm:$0xf]
    %v1524 = vld [vmem:[#allocation14 + $0x3c] sm:$0xf]
    %v1525 = vld [vmem:[#allocation14 + $0x40] sm:$0xf]
    %v1526 = vld [vmem:[#allocation14 + $0x44] sm:$0xf]
    %v1527 = vld [vmem:[#allocation14 + $0x48] sm:$0xf]
    %v1528 = vld [vmem:[#allocation14 + $0x4c] sm:$0xf]
    %v1529 = vld [vmem:[#allocation14 + $0x50] sm:$0xf]
    %v1530 = vld [vmem:[#allocation14 + $0x54] sm:$0xf]
    %v1531 = vld [vmem:[#allocation14 + $0x58] sm:$0xf]
    %v1532 = vld [vmem:[#allocation14 + $0x5c] sm:$0xf]
    %v1533 = vld [vmem:[#allocation14 + $0x60] sm:$0xf]
    %v1534 = vld [vmem:[#allocation14 + $0x64] sm:$0xf]
    %v1535 = vld [vmem:[#allocation14 + $0x68] sm:$0xf]
    %v1536 = vld [vmem:[#allocation14 + $0x6c] sm:$0xf]
    %v1537 = vld [vmem:[#allocation14 + $0x70] sm:$0xf]
    %v1538 = vld [vmem:[#allocation14 + $0x74] sm:$0xf]
    %v1539 = vld [vmem:[#allocation14 + $0x78] sm:$0xf]
    %v1540 = vld [vmem:[#allocation14 + $0x7c] sm:$0xf]
    %v1541 = vld [vmem:[%s12] sm:$0x1]
    %v1543 = vlaneseq
    %v1544 = vshrl.u32 %v1543, 7
    %v1545 = vsub.s32 0, %v1544
    %v1546 = vrot.slane %v1541, %v1545
    %v1580 = vunpack.c.l.b16 %v1509
    %v1581 = vunpack.c.l.b16 %v1510
    %v1582 = vunpack.c.l.b16 %v1511
    %v1583 = vunpack.c.l.b16 %v1512
    %v1584 = vunpack.c.l.b16 %v1513
    %v1585 = vunpack.c.l.b16 %v1514
    %v1586 = vunpack.c.l.b16 %v1515
    %v1587 = vunpack.c.l.b16 %v1516
    %v1588 = vunpack.c.l.b16 %v1517
    %v1589 = vunpack.c.l.b16 %v1518
    %v1590 = vunpack.c.l.b16 %v1519
    %v1591 = vunpack.c.l.b16 %v1520
    %v1592 = vunpack.c.l.b16 %v1521
    %v1593 = vunpack.c.l.b16 %v1522
    %v1594 = vunpack.c.l.b16 %v1523
    %v1595 = vunpack.c.l.b16 %v1524
    %v1596 = vunpack.c.l.b16 %v1525
    %v1597 = vunpack.c.l.b16 %v1526
    %v1598 = vunpack.c.l.b16 %v1527
    %v1599 = vunpack.c.l.b16 %v1528
    %v1600 = vunpack.c.l.b16 %v1529
    %v1601 = vunpack.c.l.b16 %v1530
    %v1602 = vunpack.c.l.b16 %v1531
    %v1603 = vunpack.c.l.b16 %v1532
    %v1604 = vunpack.c.l.b16 %v1533
    %v1605 = vunpack.c.l.b16 %v1534
    %v1606 = vunpack.c.l.b16 %v1535
    %v1607 = vunpack.c.l.b16 %v1536
    %v1608 = vunpack.c.l.b16 %v1537
    %v1609 = vunpack.c.l.b16 %v1538
    %v1610 = vunpack.c.l.b16 %v1539
    %v1611 = vunpack.c.l.b16 %v1540
    %v1612 = vpack.c.b16 %v1581, %v1580
    %v1613 = vpack.c.b16 %v1583, %v1582
    %v1614 = vpack.c.b16 %v1585, %v1584
    %v1615 = vpack.c.b16 %v1587, %v1586
    %v1616 = vpack.c.b16 %v1589, %v1588
    %v1617 = vpack.c.b16 %v1591, %v1590
    %v1618 = vpack.c.b16 %v1593, %v1592
    %v1619 = vpack.c.b16 %v1595, %v1594
    %v1620 = vpack.c.b16 %v1597, %v1596
    %v1621 = vpack.c.b16 %v1599, %v1598
    %v1622 = vpack.c.b16 %v1601, %v1600
    %v1623 = vpack.c.b16 %v1603, %v1602
    %v1624 = vpack.c.b16 %v1605, %v1604
    %v1625 = vpack.c.b16 %v1607, %v1606
    %v1626 = vpack.c.b16 %v1609, %v1608
    %v1627 = vpack.c.b16 %v1611, %v1610
    %1644 = vmatprep.subr.bf16.mxu0 0
    %1645 = vmatpush1.bf16.msra.mxu0 %v1612
    %1646 = vmatprep.subr.bf16.mxu0 0
    %1647 = vmatpush1.bf16.msra.mxu0 %v1613
    %1648 = vmatprep.subr.bf16.mxu0 0
    %1649 = vmatpush1.bf16.msra.mxu0 %v1614
    %1650 = vmatprep.subr.bf16.mxu0 0
    %1651 = vmatpush1.bf16.msra.mxu0 %v1615
    %1652 = vmatprep.subr.bf16.mxu0 0
    %1653 = vmatpush1.bf16.msra.mxu0 %v1616
    %1654 = vmatprep.subr.bf16.mxu0 0
    %1655 = vmatpush1.bf16.msra.mxu0 %v1617
    %1656 = vmatprep.subr.bf16.mxu0 0
    %1657 = vmatpush1.bf16.msra.mxu0 %v1618
    %1658 = vmatprep.subr.bf16.mxu0 0
    %1659 = vmatpush1.bf16.msra.mxu0 %v1619
    %1660 = vmatprep.subr.bf16.mxu0 0
    %1661 = vmatpush1.bf16.msra.mxu0 %v1620
    %1662 = vmatprep.subr.bf16.mxu0 0
    %1663 = vmatpush1.bf16.msra.mxu0 %v1621
    %1664 = vmatprep.subr.bf16.mxu0 0
    %1665 = vmatpush1.bf16.msra.mxu0 %v1622
    %1666 = vmatprep.subr.bf16.mxu0 0
    %1667 = vmatpush1.bf16.msra.mxu0 %v1623
    %1668 = vmatprep.subr.bf16.mxu0 0
    %1669 = vmatpush1.bf16.msra.mxu0 %v1624
    %1670 = vmatprep.subr.bf16.mxu0 0
    %1671 = vmatpush1.bf16.msra.mxu0 %v1625
    %1672 = vmatprep.subr.bf16.mxu0 0
    %1673 = vmatpush1.bf16.msra.mxu0 %v1626
    %1674 = vmatprep.subr.bf16.mxu0 0
    %1675 = vmatpush1.bf16.msra.mxu0 %v1627
    %1676 = vmatprep.mubr.bf16.mxu0 %v1508
    %1677 = vmatmul.mubr.bf16.gmra.mrb[0].mxu0 %v1507
    %v1678 = vpop.f32.mrb[0].mxu0
    %v1679 = vadd.f32 %v1546, %v1678
    %v1680 = vpop.f32.mrb[0].mxu0
    %v1681 = vpop.f32.mrb[0].mxu0
    %v1682 = vpop.f32.mrb[0].mxu0
    %1683 = vdwg.mxu0
    %1684 = vmax.xlane.f32.xlu0 %v1679
    %v1685 = vpop.xlane.xlu0 %1684
    %v1686 = vsub.f32 %v1679, %v1685
    %v1687 = vmul.f32 %v1686, 1.442695
    %v1688 = vpow.pop %v1687
    %1689 = vadd.xlane.f32.xlu0 %v1688
    %v1690 = vpop.xlane.xlu0 %1689
    %v1691 = vlog2.pop %v1690
    %v1692 = vmul.f32 %v1691, 0.6931472
    %v1693 = vsub.f32 %v1686, %v1692
    %1694 = vst [vmem:[#allocation16] sm:$0xff] %v1693
    // Predicated region
    $region86: #{tpu_custom_call.1} parent=1 // pred_check
      _
    $region87: #{tpu_custom_call.1} parent=1 // pred_check_branch
      %1696 = sbr.rel (0) target = $region89
    $region88: #{tpu_custom_call.1} parent=1 // pred_region
      %s1698 = ssub.s32 128, 128
      %1699 = vsyncadd [#allocation4], %s1698
      %s1701 = sshll.u32 [#allocation16], 4
      %s1702 = int_to_ptr.vmem [resolvable:$true] %s1701
      %1704 = dma.vmem_to_hbm [thread:$0]  %s1702, 128, %s13, [#allocation4]
    $region89: #{tpu_custom_call.1} parent=1 // pred_fallthru
      _
    // Predicated region
    $region90: #{tpu_custom_call.1} parent=1 // pred_check
      _
    $region91: #{tpu_custom_call.1} parent=1 // pred_check_branch
      %1706 = sbr.rel (0) target = $region93
    $region92: #{tpu_custom_call.1} parent=1 // pred_region
      %1707 = dma.done [#allocation4], 128
    $region93: #{tpu_custom_call.1} parent=1 // pred_fallthru
      _
    %1708 = vsyncpa [#allocation3], 1
    %1709 = vsyncpa [#allocation6], 1
    %1710 = vsyncpa [#allocation9], 1
    %1711 = vsyncpa [#allocation12], 1
    %1712 = vsyncpa [#allocation15], 1
    %1713 = vsyncpa [#allocation4], 1

</llo_original>
